<compile_context>
chip_gen: v5e
topology: v5e:2x2
jax: 0.10.0
libtpu: 0.0.40
codegen_flags: <defaults>
</compile_context>

<pallas_src>
import functools

import jax
import jax.numpy as jnp
from jax.experimental import pallas as pl
from jax.experimental.pallas import tpu as pltpu

EPS = 1e-5
LANE = 128
VMEM_LIMIT_BYTES = 32 * 1024 * 1024  # <= default scoped VMEM on v6e/v7x


# ----------------------------------------------------------------------------
# kernels
# ----------------------------------------------------------------------------
def _conv3x3_stats_kernel(x_ref, w_ref, sc_ref, sh_ref, y_ref, stats_ref,
                          *, apply_input_act, compute_dtype):
    """3x3 conv on one (batch, row-tile) band + per-tile BN partial stats.

    x_ref:     (1, 1, TH+2, W+2, Ci)  input band (1-row/col halo included)
    w_ref:     (9*Ci, Co)             flattened HWIO conv weights
    sc_ref:    (1, Ci)                per-channel input scale  (prev BN fold)
    sh_ref:    (1, Ci)                per-channel input shift  (prev BN fold)
    y_ref:     (1, TH, W, Co)         raw conv output (pre-BN), f32
    stats_ref: (1, 1, 2, Co)          per-tile [sum, sum_of_squares] over (TH,W)
    """
    thp2, wp2, _ = x_ref.shape[2], x_ref.shape[3], x_ref.shape[4]
    th, w = thp2 - 2, wp2 - 2

    xb = x_ref[0, 0]                                    # (TH+2, W+2, Ci)

    if apply_input_act:
        # fused BN(prev) + ReLU applied to the conv input (f32), then zero the
        # 1-pixel image border so conv padding acts on the *normalized*
        # activation (its raw padding would become relu(shift) otherwise).
        h = jnp.maximum(xb.astype(jnp.float32) * sc_ref[0] + sh_ref[0], 0.0)
        t = pl.program_id(1)
        h_total = pl.num_programs(1) * th
        row = jax.lax.broadcasted_iota(jnp.int32, (thp2, wp2), 0) + t * th
        col = jax.lax.broadcasted_iota(jnp.int32, (thp2, wp2), 1)
        interior = (row >= 1) & (row <= h_total) & (col >= 1) & (col <= w)
        h = jnp.where(interior[:, :, None], h, 0.0)
        xb = h.astype(compute_dtype)
    else:
        xb = xb.astype(compute_dtype)

    # im2col: 9 shifted views concatenated on the lane axis -> one MXU matmul.
    taps = [xb[dy:dy + th, dx:dx + w, :]
            for dy in range(3) for dx in range(3)]
    patches = jnp.concatenate(taps, axis=-1)            # (TH, W, 9*Ci)
    acc = jnp.einsum('hwk,ko->hwo', patches, w_ref[...],
                     preferred_element_type=jnp.float32)  # (TH, W, Co) f32

    y_ref[0] = acc

    s = jnp.sum(acc, axis=(0, 1), keepdims=True)[0]             # (1, Co)
    ss = jnp.sum(acc * acc, axis=(0, 1), keepdims=True)[0]      # (1, Co)
    stats_ref[0, 0, :, :] = jnp.concatenate([s, ss], axis=0)    # (2, Co)


def _bn_relu_kernel(y_ref, sc_ref, sh_ref, o_ref):
    """Final fused BatchNorm+ReLU: out = max(y*scale + shift, 0)."""
    y = y_ref[...].astype(jnp.float32)
    o_ref[...] = jnp.maximum(y * sc_ref[0] + sh_ref[0], 0.0).astype(o_ref.dtype)


# ----------------------------------------------------------------------------
# wrapper helpers
# ----------------------------------------------------------------------------
def _round_up(x, m):
    return (x + m - 1) // m * m


def _pick_tile(h, target=8):
    for t in (target, 8, 4, 2, 1):
        if t <= h and h % t == 0:
            return t
    return h


def _pad_last(a, to, value=0.0):
    pad = to - a.shape[-1]
    if pad == 0:
        return a
    cfg = [(0, 0)] * (a.ndim - 1) + [(0, pad)]
    return jnp.pad(a, cfg, constant_values=value)


def _flatten_w(w, ci_p, co_p):
    """(3,3,Ci,Co) HWIO -> zero-padded (9*Ci_p, Co_p), K ordered (dy, dx, ci)."""
    kh, kw, ci, co = w.shape
    w = jnp.pad(w, ((0, 0), (0, 0), (0, ci_p - ci), (0, co_p - co)))
    return w.reshape(kh * kw * ci_p, co_p)


def _make_bands(x_pad, tile_h):
    """(N, H+2, W+2, C) -> overlapping row bands (N, T, tile_h+2, W+2, C)."""
    h = x_pad.shape[1] - 2
    t = h // tile_h
    bands = [x_pad[:, i * tile_h: i * tile_h + tile_h + 2] for i in range(t)]
    return jnp.stack(bands, axis=1)


def _fold_bn(stats, count, gamma, beta):
    """Per-tile partial sums -> per-channel (scale, shift) for y*scale+shift."""
    s = jnp.sum(stats, axis=(0, 1))                     # (2, C)
    mean = s[0] / count
    var = jnp.maximum(s[1] / count - mean * mean, 0.0)  # biased variance
    scale = gamma * jax.lax.rsqrt(var + EPS)
    shift = beta - mean * scale
    return scale.reshape(1, -1), shift.reshape(1, -1)


def _conv_call(bands, w_flat, scale_in, shift_in, *, tile_h, H, W, Co,
               apply_input_act, compute_dtype):
    N, T = bands.shape[0], bands.shape[1]
    THp2, Wp2, Ci = bands.shape[2], bands.shape[3], bands.shape[4]

    kernel = functools.partial(_conv3x3_stats_kernel,
                               apply_input_act=apply_input_act,
                               compute_dtype=compute_dtype)
    return pl.pallas_call(
        kernel,
        grid=(N, T),
        in_specs=[
            pl.BlockSpec((1, 1, THp2, Wp2, Ci), lambda n, t: (n, t, 0, 0, 0)),
            pl.BlockSpec((9 * Ci, Co), lambda n, t: (0, 0)),
            pl.BlockSpec((1, Ci), lambda n, t: (0, 0)),
            pl.BlockSpec((1, Ci), lambda n, t: (0, 0)),
        ],
        out_specs=[
            pl.BlockSpec((1, tile_h, W, Co), lambda n, t: (n, t, 0, 0)),
            pl.BlockSpec((1, 1, 2, Co), lambda n, t: (n, t, 0, 0)),
        ],
        out_shape=[
            jax.ShapeDtypeStruct((N, H, W, Co), jnp.float32),
            jax.ShapeDtypeStruct((N, T, 2, Co), jnp.float32),
        ],
        compiler_params=pltpu.CompilerParams(
            dimension_semantics=("parallel", "parallel"),
            vmem_limit_bytes=VMEM_LIMIT_BYTES),
    )(bands, w_flat, scale_in, shift_in)


def _bn_relu_call(y_raw, scale, shift, *, tile_h):
    N, H, W, C = y_raw.shape
    T = H // tile_h
    return pl.pallas_call(
        _bn_relu_kernel,
        grid=(N, T),
        in_specs=[
            pl.BlockSpec((1, tile_h, W, C), lambda n, t: (n, t, 0, 0)),
            pl.BlockSpec((1, C), lambda n, t: (0, 0)),
            pl.BlockSpec((1, C), lambda n, t: (0, 0)),
        ],
        out_specs=pl.BlockSpec((1, tile_h, W, C), lambda n, t: (n, t, 0, 0)),
        out_shape=jax.ShapeDtypeStruct((N, H, W, C), jnp.float32),
        compiler_params=pltpu.CompilerParams(
            dimension_semantics=("parallel", "parallel"),
            vmem_limit_bytes=VMEM_LIMIT_BYTES),
    )(y_raw, scale, shift)


# ----------------------------------------------------------------------------
# public forward
# ----------------------------------------------------------------------------
def double_conv(x_nchw, params, *, compute_dtype=jnp.bfloat16, tile_h=8):
    """x_nchw: (N, Cin, H, W) float32. Returns (N, Cout, H, W) float32."""
    w1, b1, g1, be1, w2, b2, g2, be2 = params
    # conv biases cancel exactly under training-mode BN (mean subtraction)
    del b1, b2

    N, Cin, H, W = x_nchw.shape
    Cmid, Cout = w1.shape[-1], w2.shape[-1]
    Cin_p = _round_up(Cin, LANE)
    Cmid_p = _round_up(Cmid, LANE)
    Cout_p = _round_up(Cout, LANE)
    th = _pick_tile(H, tile_h)
    count = float(N * H * W)

    # lane-dense padded layouts
    x = jnp.transpose(x_nchw, (0, 2, 3, 1))                       # NHWC
    x = _pad_last(x, Cin_p)
    x = jnp.pad(x, ((0, 0), (1, 1), (1, 1), (0, 0))).astype(compute_dtype)
    xb = _make_bands(x, th)                                       # (N,T,th+2,W+2,Cin_p)

    w1f = _flatten_w(w1, Cin_p, Cmid_p).astype(compute_dtype)     # (9*Cin_p, Cmid_p)
    w2f = _flatten_w(w2, Cmid_p, Cout_p).astype(compute_dtype)    # (9*Cmid_p, Cout_p)
    g1p, be1p = _pad_last(g1, Cmid_p, 1.0), _pad_last(be1, Cmid_p, 0.0)
    g2p, be2p = _pad_last(g2, Cout_p, 1.0), _pad_last(be2, Cout_p, 0.0)

    # --- block 1: conv1 + per-tile BN1 partial stats -------------------------
    ones = jnp.ones((1, Cin_p), jnp.float32)
    zeros = jnp.zeros((1, Cin_p), jnp.float32)
    y1_raw, st1 = _conv_call(xb, w1f, ones, zeros, tile_h=th, H=H, W=W,
                             Co=Cmid_p, apply_input_act=False,
                             compute_dtype=compute_dtype)
    sc1, sh1 = _fold_bn(st1, count, g1p, be1p)

    # --- block 2: BN1+ReLU fused into conv2 input, + BN2 partial stats ------
    y1_pad = jnp.pad(y1_raw, ((0, 0), (1, 1), (1, 1), (0, 0)))
    y1b = _make_bands(y1_pad, th)                                 # f32 bands
    y2_raw, st2 = _conv_call(y1b, w2f, sc1, sh1, tile_h=th, H=H, W=W,
                             Co=Cout_p, apply_input_act=True,
                             compute_dtype=compute_dtype)
    sc2, sh2 = _fold_bn(st2, count, g2p, be2p)

    # --- final BN2 + ReLU ----------------------------------------------------
    out_p = _bn_relu_call(y2_raw, sc2, sh2, tile_h=th)            # (N,H,W,Cout_p)
    return jnp.transpose(out_p[..., :Cout], (0, 3, 1, 2))


# ----------------------------------------------------------------------------
# reference + test
# ----------------------------------------------------------------------------
def ref_forward(x, params):
    """Pure-JAX reference (NCHW), training-mode BatchNorm, for validation."""
    w1, b1, g1, be1, w2, b2, g2, be2 = params

    def conv(x, w, b):
        y = jax.lax.conv_general_dilated(
            x, w, window_strides=(1, 1), padding='SAME',
            dimension_numbers=('NCHW', 'HWIO', 'NCHW'))
        return y + b[None, :, None, None]

    def bn_relu(y, g, be):
        m = jnp.mean(y, axis=(0, 2, 3), keepdims=True)
        v = jnp.mean(jnp.square(y - m), axis=(0, 2, 3), keepdims=True)
        yn = (y - m) / jnp.sqrt(v + EPS) * g[None, :, None, None] \
            + be[None, :, None, None]
        return jnp.maximum(yn, 0.0)

    y = bn_relu(conv(x, w1, b1), g1, be1)
    return bn_relu(conv(y, w2, b2), g2, be2)


def make_params(key, in_channels, out_channels):
    ks = jax.random.split(key, 8)
    # conv weights in HWIO (3, 3, Ci, Co); equivalent to PyTorch OIHW
    w1 = jax.random.normal(ks[0], (3, 3, in_channels, out_channels), jnp.float32) * 0.1
    b1 = jax.random.normal(ks[1], (out_channels,), jnp.float32) * 0.1
    g1 = 1.0 + 0.1 * jax.random.normal(ks[2], (out_channels,), jnp.float32)
    be1 = 0.1 * jax.random.normal(ks[3], (out_channels,), jnp.float32)
    w2 = jax.random.normal(ks[4], (3, 3, out_channels, out_channels), jnp.float32) * 0.1
    b2 = jax.random.normal(ks[5], (out_channels,), jnp.float32) * 0.1
    g2 = 1.0 + 0.1 * jax.random.normal(ks[6], (out_channels,), jnp.float32)
    be2 = 0.1 * jax.random.normal(ks[7], (out_channels,), jnp.float32)
    return (w1, b1, g1, be1, w2, b2, g2, be2)


if __name__ == "__main__":
    key = jax.random.PRNGKey(0)
    k_x, k_p = jax.random.split(key)

    N, Cin, Cout, H, W = 2, 4, 8, 16, 16
    x = jax.random.normal(k_x, (N, Cin, H, W), jnp.float32)
    params = make_params(k_p, Cin, Cout)

    ref = jax.block_until_ready(ref_forward(x, params))

    # f32 compute path: tight check of the kernel's math.
    out_f32 = jax.block_until_ready(
        double_conv(x, params, compute_dtype=jnp.float32))
    assert out_f32.shape == (N, Cout, H, W), out_f32.shape
    assert jnp.allclose(out_f32, ref, rtol=1e-3, atol=1e-3), \
        float(jnp.max(jnp.abs(out_f32 - ref)))

    # default bf16-matmul path (f32 accumulation + f32 BN): bf16-level tolerance.
    out_bf16 = jax.block_until_ready(double_conv(x, params))
    assert out_bf16.shape == (N, Cout, H, W), out_bf16.shape
    assert jnp.allclose(out_bf16, ref, rtol=5e-2, atol=5e-2), \
        float(jnp.max(jnp.abs(out_bf16 - ref)))

    print("KERNEL_OK")
</pallas_src>

<mosaic_0001>
module attributes {stable_mosaic.version = 11 : i64} {
  func.func @_conv3x3_stats_kernel(%arg0: i32, %arg1: i32, %arg2: memref<1x1x10x18x128xf32, #tpu.memory_space<vmem>>, %arg3: memref<1152x128xf32, #tpu.memory_space<vmem>>, %arg4: memref<1x128xf32, #tpu.memory_space<vmem>>, %arg5: memref<1x128xf32, #tpu.memory_space<vmem>>, %arg6: memref<1x8x16x128xf32, #tpu.memory_space<vmem>>, %arg7: memref<1x1x2x128xf32, #tpu.memory_space<vmem>>) attributes {dimension_semantics = [#tpu.dimension_semantics<parallel>, #tpu.dimension_semantics<parallel>], iteration_bounds = array<i64: 2, 2>, scalar_prefetch = 0 : i64, scratch_operands = 0 : i64, tpu.core_type = #tpu.core_type<tc>, window_params = [{transform_indices = @transform_0, window_bounds = array<i64: 1, 1, 10, 18, 128>}, {pipeline_mode = #tpu.pipeline_mode<synchronous>, transform_indices = @transform_1, window_bounds = array<i64: 1152, 128>}, {pipeline_mode = #tpu.pipeline_mode<synchronous>, transform_indices = @transform_2, window_bounds = array<i64: 1, 128>}, {pipeline_mode = #tpu.pipeline_mode<synchronous>, transform_indices = @transform_3, window_bounds = array<i64: 1, 128>}, {transform_indices = @transform_4, window_bounds = array<i64: 1, 8, 16, 128>}, {transform_indices = @transform_5, window_bounds = array<i64: 1, 1, 2, 128>}]} {
    %c0 = arith.constant 0 : index
    %c0_0 = arith.constant 0 : index
    %c0_1 = arith.constant 0 : index
    %c0_2 = arith.constant 0 : index
    %c0_3 = arith.constant 0 : index
    %0 = vector.load %arg2[%c0, %c0_0, %c0_1, %c0_2, %c0_3] : memref<1x1x10x18x128xf32, #tpu.memory_space<vmem>>, vector<1x1x10x18x128xf32>
    %1 = vector.shape_cast %0 : vector<1x1x10x18x128xf32> to vector<10x18x128xf32>
    %2 = vector.extract_strided_slice %1 {offsets = [0, 0, 0], sizes = [8, 16, 128], strides = [1, 1, 1]} : vector<10x18x128xf32> to vector<8x16x128xf32>
    %3 = vector.extract_strided_slice %1 {offsets = [0, 1, 0], sizes = [8, 16, 128], strides = [1, 1, 1]} : vector<10x18x128xf32> to vector<8x16x128xf32>
    %4 = vector.extract_strided_slice %1 {offsets = [0, 2, 0], sizes = [8, 16, 128], strides = [1, 1, 1]} : vector<10x18x128xf32> to vector<8x16x128xf32>
    %5 = vector.extract_strided_slice %1 {offsets = [1, 0, 0], sizes = [8, 16, 128], strides = [1, 1, 1]} : vector<10x18x128xf32> to vector<8x16x128xf32>
    %6 = vector.extract_strided_slice %1 {offsets = [1, 1, 0], sizes = [8, 16, 128], strides = [1, 1, 1]} : vector<10x18x128xf32> to vector<8x16x128xf32>
    %7 = vector.extract_strided_slice %1 {offsets = [1, 2, 0], sizes = [8, 16, 128], strides = [1, 1, 1]} : vector<10x18x128xf32> to vector<8x16x128xf32>
    %8 = vector.extract_strided_slice %1 {offsets = [2, 0, 0], sizes = [8, 16, 128], strides = [1, 1, 1]} : vector<10x18x128xf32> to vector<8x16x128xf32>
    %9 = vector.extract_strided_slice %1 {offsets = [2, 1, 0], sizes = [8, 16, 128], strides = [1, 1, 1]} : vector<10x18x128xf32> to vector<8x16x128xf32>
    %10 = vector.extract_strided_slice %1 {offsets = [2, 2, 0], sizes = [8, 16, 128], strides = [1, 1, 1]} : vector<10x18x128xf32> to vector<8x16x128xf32>
    %11 = tpu.concatenate %2, %3, %4, %5, %6, %7, %8, %9, %10 in 2 : vector<8x16x128xf32>, vector<8x16x128xf32>, vector<8x16x128xf32>, vector<8x16x128xf32>, vector<8x16x128xf32>, vector<8x16x128xf32>, vector<8x16x128xf32>, vector<8x16x128xf32>, vector<8x16x128xf32> -> vector<8x16x1152xf32>
    %c0_4 = arith.constant 0 : index
    %c0_5 = arith.constant 0 : index
    %12 = vector.load %arg3[%c0_4, %c0_5] : memref<1152x128xf32, #tpu.memory_space<vmem>>, vector<1152x128xf32>
    "tpu.trace_start"() <{level = 10 : i32, message = "hwk,ko->hwo"}> : () -> ()
    %cst = arith.constant dense<0.000000e+00> : vector<8x16x128xf32>
    %13 = tpu.matmul %11, %12, %cst {dimension_numbers = #tpu.dot_dimension_numbers<[2], [0], [0, 1], [1], [0, 0, 0, 1, 1, 1], [], []>} : vector<8x16x1152xf32>, vector<1152x128xf32>, vector<8x16x128xf32> -> vector<8x16x128xf32>
    "tpu.trace_stop"() : () -> ()
    %c0_6 = arith.constant 0 : index
    %c0_7 = arith.constant 0 : index
    %c0_8 = arith.constant 0 : index
    %c0_9 = arith.constant 0 : index
    %14 = vector.load %arg6[%c0_6, %c0_7, %c0_8, %c0_9] : memref<1x8x16x128xf32, #tpu.memory_space<vmem>>, vector<1x8x16x128xf32>
    %15 = vector.shape_cast %14 : vector<1x8x16x128xf32> to vector<8x16x128xf32>
    %16 = vector.shape_cast %13 : vector<8x16x128xf32> to vector<1x8x16x128xf32>
    tpu.vector_store %arg6[%c0_6, %c0_7, %c0_8, %c0_9], %16 {strides = array<i32>} : memref<1x8x16x128xf32, #tpu.memory_space<vmem>>, vector<1x8x16x128xf32>,
    %cst_10 = arith.constant dense<0.000000e+00> : vector<128xf32>
    %17 = vector.multi_reduction <add>, %13, %cst_10 [0, 1] : vector<8x16x128xf32> to vector<128xf32>
    %18 = vector.shape_cast %17 : vector<128xf32> to vector<1x1x128xf32>
    %19 = vector.shape_cast %18 : vector<1x1x128xf32> to vector<1x128xf32>
    %20 = arith.mulf %13, %13 : vector<8x16x128xf32>
    %cst_11 = arith.constant dense<0.000000e+00> : vector<128xf32>
    %21 = vector.multi_reduction <add>, %20, %cst_11 [0, 1] : vector<8x16x128xf32> to vector<128xf32>
    %22 = vector.shape_cast %21 : vector<128xf32> to vector<1x1x128xf32>
    %23 = vector.shape_cast %22 : vector<1x1x128xf32> to vector<1x128xf32>
    %24 = tpu.concatenate %19, %23 in 0 : vector<1x128xf32>, vector<1x128xf32> -> vector<2x128xf32>
    %c0_12 = arith.constant 0 : index
    %c0_13 = arith.constant 0 : index
    %c0_14 = arith.constant 0 : index
    %c0_15 = arith.constant 0 : index
    %25 = vector.load %arg7[%c0_12, %c0_13, %c0_14, %c0_15] : memref<1x1x2x128xf32, #tpu.memory_space<vmem>>, vector<1x1x2x128xf32>
    %26 = vector.shape_cast %25 : vector<1x1x2x128xf32> to vector<2x128xf32>
    %27 = vector.shape_cast %24 : vector<2x128xf32> to vector<1x1x2x128xf32>
    tpu.vector_store %arg7[%c0_12, %c0_13, %c0_14, %c0_15], %27 {strides = array<i32>} : memref<1x1x2x128xf32, #tpu.memory_space<vmem>>, vector<1x1x2x128xf32>,
    return
  }
  func.func @transform_0(%arg0: i32, %arg1: i32) -> (i32, i32, i32, i32, i32) {
    %c0_i32 = arith.constant 0 : i32
    %c0_i32_0 = arith.constant 0 : i32
    %c0_i32_1 = arith.constant 0 : i32
    %c0_i32_2 = arith.constant 0 : i32
    return %arg0, %arg1, %c0_i32, %c0_i32_0, %c0_i32_1 : i32, i32, i32, i32, i32
  }
  func.func @transform_1(%arg0: i32, %arg1: i32) -> (i32, i32) {
    %c0_i32 = arith.constant 0 : i32
    %c0_i32_0 = arith.constant 0 : i32
    %c0_i32_1 = arith.constant 0 : i32
    return %c0_i32, %c0_i32_0 : i32, i32
  }
  func.func @transform_2(%arg0: i32, %arg1: i32) -> (i32, i32) {
    %c0_i32 = arith.constant 0 : i32
    %c0_i32_0 = arith.constant 0 : i32
    %c0_i32_1 = arith.constant 0 : i32
    return %c0_i32, %c0_i32_0 : i32, i32
  }
  func.func @transform_3(%arg0: i32, %arg1: i32) -> (i32, i32) {
    %c0_i32 = arith.constant 0 : i32
    %c0_i32_0 = arith.constant 0 : i32
    %c0_i32_1 = arith.constant 0 : i32
    return %c0_i32, %c0_i32_0 : i32, i32
  }
  func.func @transform_4(%arg0: i32, %arg1: i32) -> (i32, i32, i32, i32) {
    %c0_i32 = arith.constant 0 : i32
    %c0_i32_0 = arith.constant 0 : i32
    %c0_i32_1 = arith.constant 0 : i32
    return %arg0, %arg1, %c0_i32, %c0_i32_0 : i32, i32, i32, i32
  }
  func.func @transform_5(%arg0: i32, %arg1: i32) -> (i32, i32, i32, i32) {
    %c0_i32 = arith.constant 0 : i32
    %c0_i32_0 = arith.constant 0 : i32
    %c0_i32_1 = arith.constant 0 : i32
    return %arg0, %arg1, %c0_i32, %c0_i32_0 : i32, i32, i32, i32
  }
}

</mosaic_0001>

<llo_original>
// kernel: tpu_custom_call.1
$region0: #{tpu_custom_call.1}
  #allocation0 [shape = 'u32[]', space=smem, size = 0x4, offset = 0x4, fixed_abs, tag = 'smem constant byte address 0x4 - core index']
  #allocation1 [shape = 'u32[72,128]{1,0:T(1,128)}', space=vmem, size = 0x9000, scoped, tag = 'internal scratch']
  %s0 = inlined_call_operand.vmem [shape: f32[2,2,10,18,128], index: 0, kind: input, shape index: {}]
  %s1 = inlined_call_operand.vmem [shape: f32[1152,128], index: 1, kind: input, shape index: {}]
  %s2 = inlined_call_operand.vmem [shape: f32[1,128], index: 2, kind: input, shape index: {}]
  %s3 = inlined_call_operand.vmem [shape: f32[1,128], index: 3, kind: input, shape index: {}]
  %s4 = inlined_call_operand.hbm [shape: f32[2,16,16,128], index: 4, kind: output, shape index: {0}]
  %s5 = inlined_call_operand.hbm [shape: f32[2,2,2,128], index: 5, kind: output, shape index: {1}]
  %6 = xla_tuple %s4, %s5
  %s7 = sld [smem:[#allocation0]]
  $region57: #{tpu_custom_call.1} parent=0
    _
  %s9 = ssub.s32 1, %s7
  %s10 = scalar_select 0, %s9, %s7
  $region1: #{tpu_custom_call.1} parent=0
    #allocation2 [shape = 'u8[131072]{0}', space=vmem, size = 0x20000, scoped, tag = 'output window, operand 0']
    #allocation3 [shape = 's32[2]{0}', space=sflag, size = 0x8, scoped, tag = 'scoped memory for tpu_custom_call.1']
    #allocation4 [shape = 'u8[2048]{0}', space=vmem, size = 0x800, scoped, tag = 'output window, operand 1']
    #allocation5 [shape = 's32[2]{0}', space=sflag, size = 0x8, scoped, tag = 'scoped memory for tpu_custom_call.1']
    %11 = vsyncpa [#allocation3], 0
    %s12 = scalar_lea.sflag [#allocation3], 1
    %13 = vsyncpa %s12, 0
    %14 = vsyncpa [#allocation5], 0
    %s15 = scalar_lea.sflag [#allocation5], 1
    %16 = vsyncpa %s15, 0
    loop: start=0, step=1, limit=6
    $region2: #{tpu_custom_call.1} parent=1 // loop_pre_header
      _
    $region3: #{tpu_custom_call.1} parent=1 // loop_header
      %s18 = sphi 0, %s22
      %p19 = scmp.ge.s32.totalorder %s18, 6
      %s25 = sphi 0, %s37
      %s26 = sphi 0, %s33
      %s27 = sphi 0, %s25
      %s28 = sphi 0, %s26
      %s29 = sphi 0, %s27
      %s30 = sphi 0, %s28
      %s42 = sphi 0, %s44
      %s45 = sphi 0, %s42
      %s46 = sphi 0, %s45
      %s62 = sphi 0, %s46
      %s66 = sphi 0, %s66
      %s68 = sphi 0, %s66
      %s69 = sphi 0, %s68
      %s83 = sphi 0, %s69
      %s87 = sphi 0, %s87
      %s89 = sphi 0, %s87
      %s90 = sphi 0, %s89
      %s104 = sphi 0, %s90
      %s108 = sphi 0, %s108
      %s110 = sphi 0, %s108
      %s111 = sphi 0, %s110
      %s125 = sphi 0, %s111
      %s133 = sphi 0, %s135
      %s136 = sphi 0, %s133
      %s137 = sphi 0, %s136
      %s153 = sphi 0, %s137
      %s161 = sphi 0, %s163
      %s164 = sphi 0, %s161
      %s165 = sphi 0, %s164
      %s181 = sphi 0, %s165
    $region4: #{tpu_custom_call.1} parent=1 // loop_header_branch
      %21 = sbr.rel (%p19) target = $region8
    $region5: #{tpu_custom_call.1} parent=1 // loop_body
      %s23 = ssub.s32 %s18, 1
      %s24 = ssub.s32 %s18, 2
      %s31 = sadd.s32 1, %s26
      %p32 = scmp.ge.s32.totalorder %s31, 2
      %s33 = scalar_select %p32, 0, %s31
      %s34 = sadd.s32 1, %s25
      %s35 = scalar_select %p32, %s34, %s25
      %p36 = scmp.ge.s32.totalorder %s35, 2
      %s37 = scalar_select %p36, 0, %s35
      %s38 = ssub.s32 %s25, %s37
      %s39 = ssub.s32 %s26, %s33
      %s40 = sor.u32 %s38, %s39
      %p41 = scmp.eq.s32.totalorder %s40, 0
      %s43 = sadd.s32 %s42, 1
      %s44 = scalar_select %p41, %s42, %s43
      %p47 = pneg %p41
      %p48 = scmp.eq.s32.totalorder %s18, 3
      %p49 = por %p47, %p48
      %p50 = scmp.ne.s32.totalorder %s42, %s45
      %p51 = scmp.eq.s32.totalorder %s18, 0
      %p52 = por %p50, %p51
      %p53 = scmp.ne.s32.totalorder %s42, %s45
      %p54 = scmp.eq.s32.totalorder %s23, 3
      %p55 = por %p53, %p54
      %p56 = scmp.ne.s32.totalorder %s45, %s46
      %p57 = scmp.eq.s32.totalorder %s23, 0
      %p58 = por %p56, %p57
      %p59 = scmp.ne.s32.totalorder %s45, %s46
      %p60 = scmp.eq.s32.totalorder %s24, 3
      %p61 = por %p59, %p60
      %p63 = scmp.ne.s32.totalorder %s46, %s62
      %p64 = scmp.eq.s32.totalorder %s24, 0
      %p65 = por %p63, %p64
      %s67 = sadd.s32 %s66, 1
      %p70 = scmp.eq.s32.totalorder %s18, 3
      %p71 = scmp.ne.s32.totalorder %s66, %s68
      %p72 = scmp.eq.s32.totalorder %s18, 0
      %p73 = por %p71, %p72
      %p74 = scmp.ne.s32.totalorder %s66, %s68
      %p75 = scmp.eq.s32.totalorder %s23, 3
      %p76 = por %p74, %p75
      %p77 = scmp.ne.s32.totalorder %s68, %s69
      %p78 = scmp.eq.s32.totalorder %s23, 0
      %p79 = por %p77, %p78
      %p80 = scmp.ne.s32.totalorder %s68, %s69
      %p81 = scmp.eq.s32.totalorder %s24, 3
      %p82 = por %p80, %p81
      %p84 = scmp.ne.s32.totalorder %s69, %s83
      %p85 = scmp.eq.s32.totalorder %s24, 0
      %p86 = por %p84, %p85
      %s88 = sadd.s32 %s87, 1
      %p91 = scmp.eq.s32.totalorder %s18, 3
      %p92 = scmp.ne.s32.totalorder %s87, %s89
      %p93 = scmp.eq.s32.totalorder %s18, 0
      %p94 = por %p92, %p93
      %p95 = scmp.ne.s32.totalorder %s87, %s89
      %p96 = scmp.eq.s32.totalorder %s23, 3
      %p97 = por %p95, %p96
      %p98 = scmp.ne.s32.totalorder %s89, %s90
      %p99 = scmp.eq.s32.totalorder %s23, 0
      %p100 = por %p98, %p99
      %p101 = scmp.ne.s32.totalorder %s89, %s90
      %p102 = scmp.eq.s32.totalorder %s24, 3
      %p103 = por %p101, %p102
      %p105 = scmp.ne.s32.totalorder %s90, %s104
      %p106 = scmp.eq.s32.totalorder %s24, 0
      %p107 = por %p105, %p106
      %s109 = sadd.s32 %s108, 1
      %p112 = scmp.eq.s32.totalorder %s18, 3
      %p113 = scmp.ne.s32.totalorder %s108, %s110
      %p114 = scmp.eq.s32.totalorder %s18, 0
      %p115 = por %p113, %p114
      %p116 = scmp.ne.s32.totalorder %s108, %s110
      %p117 = scmp.eq.s32.totalorder %s23, 3
      %p118 = por %p116, %p117
      %p119 = scmp.ne.s32.totalorder %s110, %s111
      %p120 = scmp.eq.s32.totalorder %s23, 0
      %p121 = por %p119, %p120
      %p122 = scmp.ne.s32.totalorder %s110, %s111
      %p123 = scmp.eq.s32.totalorder %s24, 3
      %p124 = por %p122, %p123
      %p126 = scmp.ne.s32.totalorder %s111, %s125
      %p127 = scmp.eq.s32.totalorder %s24, 0
      %p128 = por %p126, %p127
      %s129 = ssub.s32 %s25, %s37
      %s130 = ssub.s32 %s26, %s33
      %s131 = sor.u32 %s129, %s130
      %p132 = scmp.eq.s32.totalorder %s131, 0
      %s134 = sadd.s32 %s133, 1
      %s135 = scalar_select %p132, %s133, %s134
      %p138 = pneg %p132
      %p139 = scmp.eq.s32.totalorder %s18, 3
      %p140 = por %p138, %p139
      %p141 = scmp.ne.s32.totalorder %s133, %s136
      %p142 = scmp.eq.s32.totalorder %s18, 0
      %p143 = por %p141, %p142
      %p144 = scmp.ne.s32.totalorder %s133, %s136
      %p145 = scmp.eq.s32.totalorder %s23, 3
      %p146 = por %p144, %p145
      %p147 = scmp.ne.s32.totalorder %s136, %s137
      %p148 = scmp.eq.s32.totalorder %s23, 0
      %p149 = por %p147, %p148
      %p150 = scmp.ne.s32.totalorder %s136, %s137
      %p151 = scmp.eq.s32.totalorder %s24, 3
      %p152 = por %p150, %p151
      %p154 = scmp.ne.s32.totalorder %s137, %s153
      %p155 = scmp.eq.s32.totalorder %s24, 0
      %p156 = por %p154, %p155
      %s157 = ssub.s32 %s25, %s37
      %s158 = ssub.s32 %s26, %s33
      %s159 = sor.u32 %s157, %s158
      %p160 = scmp.eq.s32.totalorder %s159, 0
      %s162 = sadd.s32 %s161, 1
      %s163 = scalar_select %p160, %s161, %s162
      %p166 = pneg %p160
      %p167 = scmp.eq.s32.totalorder %s18, 3
      %p168 = por %p166, %p167
      %p169 = scmp.ne.s32.totalorder %s161, %s164
      %p170 = scmp.eq.s32.totalorder %s18, 0
      %p171 = por %p169, %p170
      %p172 = scmp.ne.s32.totalorder %s161, %s164
      %p173 = scmp.eq.s32.totalorder %s23, 3
      %p174 = por %p172, %p173
      %p175 = scmp.ne.s32.totalorder %s164, %s165
      %p176 = scmp.eq.s32.totalorder %s23, 0
      %p177 = por %p175, %p176
      %p178 = scmp.ne.s32.totalorder %s164, %s165
      %p179 = scmp.eq.s32.totalorder %s24, 3
      %p180 = por %p178, %p179
      %p182 = scmp.ne.s32.totalorder %s165, %s181
      %p183 = scmp.eq.s32.totalorder %s24, 0
      %p184 = por %p182, %p183
      %p185 = scmp.le.s32.totalorder 1, %s18
      %p186 = scmp.lt.s32.totalorder %s18, 5
      %p187 = pnand %p185, %p186
      %p188 = pneg %p187
      // Predicated region
      $region9: #{tpu_custom_call.1} parent=5 // pred_check
        _
      $region10: #{tpu_custom_call.1} parent=5 // pred_check_branch
        %190 = sbr.rel (%p187) target = $region12
      $region11: #{tpu_custom_call.1} parent=5 // pred_region
        %s191 = ssub.s32 %s18, 1
        // Predicated region
        $region13: #{tpu_custom_call.1} parent=11 // pred_check
          %p192 = pneg %p79
        $region14: #{tpu_custom_call.1} parent=11 // pred_check_branch
          %194 = sbr.rel (%p192) target = $region16
        $region15: #{tpu_custom_call.1} parent=11 // pred_region
          _
        $region16: #{tpu_custom_call.1} parent=11 // pred_fallthru
          _
        // Predicated region
        $region17: #{tpu_custom_call.1} parent=11 // pred_check
          %p195 = pneg %p100
        $region18: #{tpu_custom_call.1} parent=11 // pred_check_branch
          %197 = sbr.rel (%p195) target = $region20
        $region19: #{tpu_custom_call.1} parent=11 // pred_region
          _
        $region20: #{tpu_custom_call.1} parent=11 // pred_fallthru
          _
        // Predicated region
        $region21: #{tpu_custom_call.1} parent=11 // pred_check
          %p198 = pneg %p121
        $region22: #{tpu_custom_call.1} parent=11 // pred_check_branch
          %200 = sbr.rel (%p198) target = $region24
        $region23: #{tpu_custom_call.1} parent=11 // pred_region
          _
        $region24: #{tpu_custom_call.1} parent=11 // pred_fallthru
          _
      $region12: #{tpu_custom_call.1} parent=5 // pred_fallthru
        _
      %p201 = scmp.lt.s32.totalorder %s18, 4
      // Predicated region
      $region25: #{tpu_custom_call.1} parent=5 // pred_check
        %p202 = pneg %p201
      $region26: #{tpu_custom_call.1} parent=5 // pred_check_branch
        %204 = sbr.rel (%p202) target = $region28
      $region27: #{tpu_custom_call.1} parent=5 // pred_region
        // Predicated region
        $region29: #{tpu_custom_call.1} parent=27 // pred_check
          %p205 = pneg %p52
        $region30: #{tpu_custom_call.1} parent=27 // pred_check_branch
          %207 = sbr.rel (%p205) target = $region32
        $region31: #{tpu_custom_call.1} parent=27 // pred_region
          %p208 = scmp.lt.s32.totalorder %s25, 1
          %s209 = scalar_select %p208, %s25, 1
          %p210 = scmp.lt.s32.totalorder %s26, 1
          %s211 = scalar_select %p210, %s26, 1
          %s212 = smul.addr %s211, 30
          %s213 = smul.addr %s209, 60
          %s214 = sadd.s32 %s212, %s213
          %s215 = smul.addr %s214, 8
          %s216 = scalar_lea.vmem %s0, %s215
        $region32: #{tpu_custom_call.1} parent=27 // pred_fallthru
          _
      $region28: #{tpu_custom_call.1} parent=5 // pred_fallthru
        _
      %p217 = scmp.le.s32.totalorder 1, %s18
      %p218 = scmp.lt.s32.totalorder %s18, 5
      %p219 = pnand %p217, %p218
      %p220 = pneg %p219
      // Predicated region
      $region33: #{tpu_custom_call.1} parent=5 // pred_check
        _
      $region34: #{tpu_custom_call.1} parent=5 // pred_check_branch
        %222 = sbr.rel (%p219) target = $region36
      $region35: #{tpu_custom_call.1} parent=5 // pred_region
        %s223 = ssub.s32 %s18, 1
        %p224 = scmp.lt.s32.totalorder %s27, 1
        %s225 = scalar_select %p224, %s27, 1
        %p226 = scmp.lt.s32.totalorder %s28, 1
        %s227 = scalar_select %p226, %s28, 1
        %s228 = smul.addr %s227, 30
        %s229 = smul.addr %s225, 60
        %s230 = sadd.s32 %s228, %s229
        %s231 = smul.addr %s230, 8
        %s232 = scalar_lea.vmem %s0, %s231
        %p233 = pneg %p58
        %p234 = pneg %p55
        %p235 = pneg %p79
        %p236 = pneg %p76
        %p237 = pneg %p100
        %p238 = pneg %p97
        %p239 = pneg %p121
        %p240 = pneg %p118
        %p241 = pneg %p149
        %p242 = pneg %p146
        %s243 = sand.u32 %s136, 1
        %s244 = scalar_lea.sflag [#allocation3], %s243
        %s245 = sand.u32 %s136, 1
        %s246 = smul.addr %s245, 128
        %s247 = scalar_lea.vmem [#allocation2], %s246
        %p248 = pneg %p177
        %p249 = pneg %p174
        %s250 = sand.u32 %s164, 1
        %s251 = scalar_lea.sflag [#allocation5], %s250
        %s252 = sand.u32 %s164, 1
        %s253 = smul.addr %s252, 2
        %s254 = scalar_lea.vmem [#allocation4], %s253
        %p255 = scmp.lt.s32.totalorder %s27, 1
        %s256 = scalar_select %p255, %s27, 1
        %p257 = scmp.lt.s32.totalorder %s28, 1
        %s258 = scalar_select %p257, %s28, 1
        %s259 = smul.addr %s258, 30
        %s260 = smul.addr %s256, 60
        %s261 = sadd.s32 %s259, %s260
        %s262 = smul.addr %s261, 8
        %s263 = scalar_lea.vmem %s0, %s262
        %s264 = smul.u32 8, %s28
        %v265 = vld [vmem:[%s263] sm:$0xff]
        %v266 = vld [vmem:[%s263 + $0x8] sm:$0xff]
        %v267 = vld [vmem:[%s263 + $0x10] sm:$0x3]
        %v268 = vld [vmem:[%s263 + $0x18] sm:$0xff]
        %v269 = vld [vmem:[%s263 + $0x20] sm:$0xff]
        %v270 = vld [vmem:[%s263 + $0x28] sm:$0x3]
        %v271 = vld [vmem:[%s263 + $0x30] sm:$0xff]
        %v272 = vld [vmem:[%s263 + $0x38] sm:$0xff]
        %v273 = vld [vmem:[%s263 + $0x40] sm:$0x3]
        %v274 = vld [vmem:[%s263 + $0x48] sm:$0xff]
        %v275 = vld [vmem:[%s263 + $0x50] sm:$0xff]
        %v276 = vld [vmem:[%s263 + $0x58] sm:$0x3]
        %v277 = vld [vmem:[%s263 + $0x60] sm:$0xff]
        %v278 = vld [vmem:[%s263 + $0x68] sm:$0xff]
        %v279 = vld [vmem:[%s263 + $0x70] sm:$0x3]
        %v280 = vld [vmem:[%s263 + $0x78] sm:$0xff]
        %v281 = vld [vmem:[%s263 + $0x80] sm:$0xff]
        %v282 = vld [vmem:[%s263 + $0x88] sm:$0x3]
        %v283 = vld [vmem:[%s263 + $0x90] sm:$0xff]
        %v284 = vld [vmem:[%s263 + $0x98] sm:$0xff]
        %v285 = vld [vmem:[%s263 + $0xa0] sm:$0x3]
        %v286 = vld [vmem:[%s263 + $0xa8] sm:$0xff]
        %v287 = vld [vmem:[%s263 + $0xb0] sm:$0xff]
        %v288 = vld [vmem:[%s263 + $0xb8] sm:$0x3]
        %v289 = vld [vmem:[%s263 + $0xc0] sm:$0xff]
        %v290 = vld [vmem:[%s263 + $0xc8] sm:$0xff]
        %v291 = vld [vmem:[%s263 + $0xd0] sm:$0x3]
        %v292 = vld [vmem:[%s263 + $0xd8] sm:$0xff]
        %v293 = vld [vmem:[%s263 + $0xe0] sm:$0xff]
        %v294 = vld [vmem:[%s263 + $0xe8] sm:$0x3]
        %vm319 = vcmask 1046528
        %v320 = vrot.slane %v265, 1
        %v321 = vrot.slane %v266, 1
        %v322 = vsel %vm319, %v320, %v321
        %v323 = vrot.slane %v267, 1
        %v324 = vsel %vm319, %v321, %v323
        %v325 = vrot.slane %v268, 1
        %v326 = vrot.slane %v269, 1
        %v327 = vsel %vm319, %v325, %v326
        %v328 = vrot.slane %v270, 1
        %v329 = vsel %vm319, %v326, %v328
        %v330 = vrot.slane %v271, 1
        %v331 = vrot.slane %v272, 1
        %v332 = vsel %vm319, %v330, %v331
        %v333 = vrot.slane %v273, 1
        %v334 = vsel %vm319, %v331, %v333
        %v335 = vrot.slane %v274, 1
        %v336 = vrot.slane %v275, 1
        %v337 = vsel %vm319, %v335, %v336
        %v338 = vrot.slane %v276, 1
        %v339 = vsel %vm319, %v336, %v338
        %v340 = vrot.slane %v277, 1
        %v341 = vrot.slane %v278, 1
        %v342 = vsel %vm319, %v340, %v341
        %v343 = vrot.slane %v279, 1
        %v344 = vsel %vm319, %v341, %v343
        %v345 = vrot.slane %v280, 1
        %v346 = vrot.slane %v281, 1
        %v347 = vsel %vm319, %v345, %v346
        %v348 = vrot.slane %v282, 1
        %v349 = vsel %vm319, %v346, %v348
        %v350 = vrot.slane %v283, 1
        %v351 = vrot.slane %v284, 1
        %v352 = vsel %vm319, %v350, %v351
        %v353 = vrot.slane %v285, 1
        %v354 = vsel %vm319, %v351, %v353
        %v355 = vrot.slane %v286, 1
        %v356 = vrot.slane %v287, 1
        %v357 = vsel %vm319, %v355, %v356
        %v358 = vrot.slane %v288, 1
        %v359 = vsel %vm319, %v356, %v358
        %vm376 = vcmask 1045504
        %v377 = vrot.slane %v265, 2
        %v378 = vrot.slane %v266, 2
        %v379 = vsel %vm376, %v377, %v378
        %v380 = vrot.slane %v267, 2
        %v381 = vsel %vm376, %v378, %v380
        %v382 = vrot.slane %v268, 2
        %v383 = vrot.slane %v269, 2
        %v384 = vsel %vm376, %v382, %v383
        %v385 = vrot.slane %v270, 2
        %v386 = vsel %vm376, %v383, %v385
        %v387 = vrot.slane %v271, 2
        %v388 = vrot.slane %v272, 2
        %v389 = vsel %vm376, %v387, %v388
        %v390 = vrot.slane %v273, 2
        %v391 = vsel %vm376, %v388, %v390
        %v392 = vrot.slane %v274, 2
        %v393 = vrot.slane %v275, 2
        %v394 = vsel %vm376, %v392, %v393
        %v395 = vrot.slane %v276, 2
        %v396 = vsel %vm376, %v393, %v395
        %v397 = vrot.slane %v277, 2
        %v398 = vrot.slane %v278, 2
        %v399 = vsel %vm376, %v397, %v398
        %v400 = vrot.slane %v279, 2
        %v401 = vsel %vm376, %v398, %v400
        %v402 = vrot.slane %v280, 2
        %v403 = vrot.slane %v281, 2
        %v404 = vsel %vm376, %v402, %v403
        %v405 = vrot.slane %v282, 2
        %v406 = vsel %vm376, %v403, %v405
        %v407 = vrot.slane %v283, 2
        %v408 = vrot.slane %v284, 2
        %v409 = vsel %vm376, %v407, %v408
        %v410 = vrot.slane %v285, 2
        %v411 = vsel %vm376, %v408, %v410
        %v412 = vrot.slane %v286, 2
        %v413 = vrot.slane %v287, 2
        %v414 = vsel %vm376, %v412, %v413
        %v415 = vrot.slane %v288, 2
        %v416 = vsel %vm376, %v413, %v415
        %v436 = vrot.slane %v289, 1
        %v437 = vrot.slane %v290, 1
        %v438 = vsel %vm319, %v436, %v437
        %v439 = vrot.slane %v291, 1
        %v440 = vsel %vm319, %v437, %v439
        %v443 = vrot.slane %v289, 2
        %v444 = vrot.slane %v290, 2
        %v445 = vsel %vm376, %v443, %v444
        %v446 = vrot.slane %v291, 2
        %v447 = vsel %vm376, %v444, %v446
        %v453 = vrot.slane %v292, 1
        %v454 = vrot.slane %v293, 1
        %v455 = vsel %vm319, %v453, %v454
        %v456 = vrot.slane %v294, 1
        %v457 = vsel %vm319, %v454, %v456
        %v460 = vrot.slane %v292, 2
        %v461 = vrot.slane %v293, 2
        %v462 = vsel %vm376, %v460, %v461
        %v463 = vrot.slane %v294, 2
        %v464 = vsel %vm376, %v461, %v463
        %v467 = vld [vmem:[%s1] sm:$0xff]
        %v468 = vld [vmem:[%s1 + $0x8] sm:$0xff]
        %v469 = vld [vmem:[%s1 + $0x10] sm:$0xff]
        %v470 = vld [vmem:[%s1 + $0x18] sm:$0xff]
        %v471 = vld [vmem:[%s1 + $0x20] sm:$0xff]
        %v472 = vld [vmem:[%s1 + $0x28] sm:$0xff]
        %v473 = vld [vmem:[%s1 + $0x30] sm:$0xff]
        %v474 = vld [vmem:[%s1 + $0x38] sm:$0xff]
        %v475 = vld [vmem:[%s1 + $0x40] sm:$0xff]
        %v476 = vld [vmem:[%s1 + $0x48] sm:$0xff]
        %v477 = vld [vmem:[%s1 + $0x50] sm:$0xff]
        %v478 = vld [vmem:[%s1 + $0x58] sm:$0xff]
        %v479 = vld [vmem:[%s1 + $0x60] sm:$0xff]
        %v480 = vld [vmem:[%s1 + $0x68] sm:$0xff]
        %v481 = vld [vmem:[%s1 + $0x70] sm:$0xff]
        %v482 = vld [vmem:[%s1 + $0x78] sm:$0xff]
        %v483 = vld [vmem:[%s1 + $0x80] sm:$0xff]
        %v484 = vld [vmem:[%s1 + $0x88] sm:$0xff]
        %v485 = vld [vmem:[%s1 + $0x90] sm:$0xff]
        %v486 = vld [vmem:[%s1 + $0x98] sm:$0xff]
        %v487 = vld [vmem:[%s1 + $0xa0] sm:$0xff]
        %v488 = vld [vmem:[%s1 + $0xa8] sm:$0xff]
        %v489 = vld [vmem:[%s1 + $0xb0] sm:$0xff]
        %v490 = vld [vmem:[%s1 + $0xb8] sm:$0xff]
        %v491 = vld [vmem:[%s1 + $0xc0] sm:$0xff]
        %v492 = vld [vmem:[%s1 + $0xc8] sm:$0xff]
        %v493 = vld [vmem:[%s1 + $0xd0] sm:$0xff]
        %v494 = vld [vmem:[%s1 + $0xd8] sm:$0xff]
        %v495 = vld [vmem:[%s1 + $0xe0] sm:$0xff]
        %v496 = vld [vmem:[%s1 + $0xe8] sm:$0xff]
        %v497 = vld [vmem:[%s1 + $0xf0] sm:$0xff]
        %v498 = vld [vmem:[%s1 + $0xf8] sm:$0xff]
        %v499 = vld [vmem:[%s1 + $0x100] sm:$0xff]
        %v500 = vld [vmem:[%s1 + $0x108] sm:$0xff]
        %v501 = vld [vmem:[%s1 + $0x110] sm:$0xff]
        %v502 = vld [vmem:[%s1 + $0x118] sm:$0xff]
        %v503 = vld [vmem:[%s1 + $0x120] sm:$0xff]
        %v504 = vld [vmem:[%s1 + $0x128] sm:$0xff]
        %v505 = vld [vmem:[%s1 + $0x130] sm:$0xff]
        %v506 = vld [vmem:[%s1 + $0x138] sm:$0xff]
        %v507 = vld [vmem:[%s1 + $0x140] sm:$0xff]
        %v508 = vld [vmem:[%s1 + $0x148] sm:$0xff]
        %v509 = vld [vmem:[%s1 + $0x150] sm:$0xff]
        %v510 = vld [vmem:[%s1 + $0x158] sm:$0xff]
        %v511 = vld [vmem:[%s1 + $0x160] sm:$0xff]
        %v512 = vld [vmem:[%s1 + $0x168] sm:$0xff]
        %v513 = vld [vmem:[%s1 + $0x170] sm:$0xff]
        %v514 = vld [vmem:[%s1 + $0x178] sm:$0xff]
        %v515 = vld [vmem:[%s1 + $0x180] sm:$0xff]
        %v516 = vld [vmem:[%s1 + $0x188] sm:$0xff]
        %v517 = vld [vmem:[%s1 + $0x190] sm:$0xff]
        %v518 = vld [vmem:[%s1 + $0x198] sm:$0xff]
        %v519 = vld [vmem:[%s1 + $0x1a0] sm:$0xff]
        %v520 = vld [vmem:[%s1 + $0x1a8] sm:$0xff]
        %v521 = vld [vmem:[%s1 + $0x1b0] sm:$0xff]
        %v522 = vld [vmem:[%s1 + $0x1b8] sm:$0xff]
        %v523 = vld [vmem:[%s1 + $0x1c0] sm:$0xff]
        %v524 = vld [vmem:[%s1 + $0x1c8] sm:$0xff]
        %v525 = vld [vmem:[%s1 + $0x1d0] sm:$0xff]
        %v526 = vld [vmem:[%s1 + $0x1d8] sm:$0xff]
        %v527 = vld [vmem:[%s1 + $0x1e0] sm:$0xff]
        %v528 = vld [vmem:[%s1 + $0x1e8] sm:$0xff]
        %v529 = vld [vmem:[%s1 + $0x1f0] sm:$0xff]
        %v530 = vld [vmem:[%s1 + $0x1f8] sm:$0xff]
        %v531 = vld [vmem:[%s1 + $0x200] sm:$0xff]
        %v532 = vld [vmem:[%s1 + $0x208] sm:$0xff]
        %v533 = vld [vmem:[%s1 + $0x210] sm:$0xff]
        %v534 = vld [vmem:[%s1 + $0x218] sm:$0xff]
        %v535 = vld [vmem:[%s1 + $0x220] sm:$0xff]
        %v536 = vld [vmem:[%s1 + $0x228] sm:$0xff]
        %v537 = vld [vmem:[%s1 + $0x230] sm:$0xff]
        %v538 = vld [vmem:[%s1 + $0x238] sm:$0xff]
        %v539 = vld [vmem:[%s1 + $0x240] sm:$0xff]
        %v540 = vld [vmem:[%s1 + $0x248] sm:$0xff]
        %v541 = vld [vmem:[%s1 + $0x250] sm:$0xff]
        %v542 = vld [vmem:[%s1 + $0x258] sm:$0xff]
        %v543 = vld [vmem:[%s1 + $0x260] sm:$0xff]
        %v544 = vld [vmem:[%s1 + $0x268] sm:$0xff]
        %v545 = vld [vmem:[%s1 + $0x270] sm:$0xff]
        %v546 = vld [vmem:[%s1 + $0x278] sm:$0xff]
        %v547 = vld [vmem:[%s1 + $0x280] sm:$0xff]
        %v548 = vld [vmem:[%s1 + $0x288] sm:$0xff]
        %v549 = vld [vmem:[%s1 + $0x290] sm:$0xff]
        %v550 = vld [vmem:[%s1 + $0x298] sm:$0xff]
        %v551 = vld [vmem:[%s1 + $0x2a0] sm:$0xff]
        %v552 = vld [vmem:[%s1 + $0x2a8] sm:$0xff]
        %v553 = vld [vmem:[%s1 + $0x2b0] sm:$0xff]
        %v554 = vld [vmem:[%s1 + $0x2b8] sm:$0xff]
        %v555 = vld [vmem:[%s1 + $0x2c0] sm:$0xff]
        %v556 = vld [vmem:[%s1 + $0x2c8] sm:$0xff]
        %v557 = vld [vmem:[%s1 + $0x2d0] sm:$0xff]
        %v558 = vld [vmem:[%s1 + $0x2d8] sm:$0xff]
        %v559 = vld [vmem:[%s1 + $0x2e0] sm:$0xff]
        %v560 = vld [vmem:[%s1 + $0x2e8] sm:$0xff]
        %v561 = vld [vmem:[%s1 + $0x2f0] sm:$0xff]
        %v562 = vld [vmem:[%s1 + $0x2f8] sm:$0xff]
        %v563 = vld [vmem:[%s1 + $0x300] sm:$0xff]
        %v564 = vld [vmem:[%s1 + $0x308] sm:$0xff]
        %v565 = vld [vmem:[%s1 + $0x310] sm:$0xff]
        %v566 = vld [vmem:[%s1 + $0x318] sm:$0xff]
        %v567 = vld [vmem:[%s1 + $0x320] sm:$0xff]
        %v568 = vld [vmem:[%s1 + $0x328] sm:$0xff]
        %v569 = vld [vmem:[%s1 + $0x330] sm:$0xff]
        %v570 = vld [vmem:[%s1 + $0x338] sm:$0xff]
        %v571 = vld [vmem:[%s1 + $0x340] sm:$0xff]
        %v572 = vld [vmem:[%s1 + $0x348] sm:$0xff]
        %v573 = vld [vmem:[%s1 + $0x350] sm:$0xff]
        %v574 = vld [vmem:[%s1 + $0x358] sm:$0xff]
        %v575 = vld [vmem:[%s1 + $0x360] sm:$0xff]
        %v576 = vld [vmem:[%s1 + $0x368] sm:$0xff]
        %v577 = vld [vmem:[%s1 + $0x370] sm:$0xff]
        %v578 = vld [vmem:[%s1 + $0x378] sm:$0xff]
        %v579 = vld [vmem:[%s1 + $0x380] sm:$0xff]
        %v580 = vld [vmem:[%s1 + $0x388] sm:$0xff]
        %v581 = vld [vmem:[%s1 + $0x390] sm:$0xff]
        %v582 = vld [vmem:[%s1 + $0x398] sm:$0xff]
        %v583 = vld [vmem:[%s1 + $0x3a0] sm:$0xff]
        %v584 = vld [vmem:[%s1 + $0x3a8] sm:$0xff]
        %v585 = vld [vmem:[%s1 + $0x3b0] sm:$0xff]
        %v586 = vld [vmem:[%s1 + $0x3b8] sm:$0xff]
        %v587 = vld [vmem:[%s1 + $0x3c0] sm:$0xff]
        %v588 = vld [vmem:[%s1 + $0x3c8] sm:$0xff]
        %v589 = vld [vmem:[%s1 + $0x3d0] sm:$0xff]
        %v590 = vld [vmem:[%s1 + $0x3d8] sm:$0xff]
        %v591 = vld [vmem:[%s1 + $0x3e0] sm:$0xff]
        %v592 = vld [vmem:[%s1 + $0x3e8] sm:$0xff]
        %v593 = vld [vmem:[%s1 + $0x3f0] sm:$0xff]
        %v594 = vld [vmem:[%s1 + $0x3f8] sm:$0xff]
        %v595 = vld [vmem:[%s1 + $0x400] sm:$0xff]
        %v596 = vld [vmem:[%s1 + $0x408] sm:$0xff]
        %v597 = vld [vmem:[%s1 + $0x410] sm:$0xff]
        %v598 = vld [vmem:[%s1 + $0x418] sm:$0xff]
        %v599 = vld [vmem:[%s1 + $0x420] sm:$0xff]
        %v600 = vld [vmem:[%s1 + $0x428] sm:$0xff]
        %v601 = vld [vmem:[%s1 + $0x430] sm:$0xff]
        %v602 = vld [vmem:[%s1 + $0x438] sm:$0xff]
        %v603 = vld [vmem:[%s1 + $0x440] sm:$0xff]
        %v604 = vld [vmem:[%s1 + $0x448] sm:$0xff]
        %v605 = vld [vmem:[%s1 + $0x450] sm:$0xff]
        %v606 = vld [vmem:[%s1 + $0x458] sm:$0xff]
        %v607 = vld [vmem:[%s1 + $0x460] sm:$0xff]
        %v608 = vld [vmem:[%s1 + $0x468] sm:$0xff]
        %v609 = vld [vmem:[%s1 + $0x470] sm:$0xff]
        %v610 = vld [vmem:[%s1 + $0x478] sm:$0xff]
        %611 = vmatpush.msra.mxu0 %v482
        %612 = vmatpush.msra.mxu0 %v481
        %613 = vmatpush.msra.mxu0 %v480
        %614 = vmatpush.msra.mxu0 %v479
        %615 = vmatpush.msra.mxu0 %v478
        %616 = vmatpush.msra.mxu0 %v477
        %617 = vmatpush.msra.mxu0 %v476
        %618 = vmatpush.msra.mxu0 %v475
        %619 = vmatpush.msra.mxu0 %v474
        %620 = vmatpush.msra.mxu0 %v473
        %621 = vmatpush.msra.mxu0 %v472
        %622 = vmatpush.msra.mxu0 %v471
        %623 = vmatpush.msra.mxu0 %v470
        %624 = vmatpush.msra.mxu0 %v469
        %625 = vmatpush.msra.mxu0 %v468
        %626 = vmatpush.msra.mxu0 %v467
        %627 = vmatmul.f32.gmra.mxu0 %v265
        %v628 = vpop.f32.mrf.mxu0
        %v629 = vadd.f32 0.0, %v628
        %630 = vmatmul.f32.gmra.mxu0 %v266
        %v631 = vpop.f32.mrf.mxu0
        %v632 = vadd.f32 0.0, %v631
        %633 = vmatmul.f32.gmra.mxu0 %v268
        %v634 = vpop.f32.mrf.mxu0
        %v635 = vadd.f32 0.0, %v634
        %636 = vmatmul.f32.gmra.mxu0 %v269
        %v637 = vpop.f32.mrf.mxu0
        %v638 = vadd.f32 0.0, %v637
        %639 = vmatmul.f32.gmra.mxu0 %v271
        %v640 = vpop.f32.mrf.mxu0
        %v641 = vadd.f32 0.0, %v640
        %642 = vmatmul.f32.gmra.mxu0 %v272
        %v643 = vpop.f32.mrf.mxu0
        %v644 = vadd.f32 0.0, %v643
        %645 = vmatmul.f32.gmra.mxu0 %v274
        %v646 = vpop.f32.mrf.mxu0
        %v647 = vadd.f32 0.0, %v646
        %648 = vmatmul.f32.gmra.mxu0 %v275
        %v649 = vpop.f32.mrf.mxu0
        %v650 = vadd.f32 0.0, %v649
        %651 = vmatmul.f32.gmra.mxu0 %v277
        %v652 = vpop.f32.mrf.mxu0
        %v653 = vadd.f32 0.0, %v652
        %654 = vmatmul.f32.gmra.mxu0 %v278
        %v655 = vpop.f32.mrf.mxu0
        %v656 = vadd.f32 0.0, %v655
        %657 = vmatmul.f32.gmra.mxu0 %v280
        %v658 = vpop.f32.mrf.mxu0
        %v659 = vadd.f32 0.0, %v658
        %660 = vmatmul.f32.gmra.mxu0 %v281
        %v661 = vpop.f32.mrf.mxu0
        %v662 = vadd.f32 0.0, %v661
        %663 = vmatmul.f32.gmra.mxu0 %v283
        %v664 = vpop.f32.mrf.mxu0
        %v665 = vadd.f32 0.0, %v664
        %666 = vmatmul.f32.gmra.mxu0 %v284
        %v667 = vpop.f32.mrf.mxu0
        %v668 = vadd.f32 0.0, %v667
        %669 = vmatmul.f32.gmra.mxu0 %v286
        %v670 = vpop.f32.mrf.mxu0
        %v671 = vadd.f32 0.0, %v670
        %672 = vmatmul.f32.gmra.mxu0 %v287
        %v673 = vpop.f32.mrf.mxu0
        %v674 = vadd.f32 0.0, %v673
        %675 = vdwg.mxu0
        %676 = vmatpush.msra.mxu0 %v498
        %677 = vmatpush.msra.mxu0 %v497
        %678 = vmatpush.msra.mxu0 %v496
        %679 = vmatpush.msra.mxu0 %v495
        %680 = vmatpush.msra.mxu0 %v494
        %681 = vmatpush.msra.mxu0 %v493
        %682 = vmatpush.msra.mxu0 %v492
        %683 = vmatpush.msra.mxu0 %v491
        %684 = vmatpush.msra.mxu0 %v490
        %685 = vmatpush.msra.mxu0 %v489
        %686 = vmatpush.msra.mxu0 %v488
        %687 = vmatpush.msra.mxu0 %v487
        %688 = vmatpush.msra.mxu0 %v486
        %689 = vmatpush.msra.mxu0 %v485
        %690 = vmatpush.msra.mxu0 %v484
        %691 = vmatpush.msra.mxu0 %v483
        %692 = vmatmul.f32.gmra.mxu0 %v322
        %v693 = vpop.f32.mrf.mxu0
        %v694 = vadd.f32 %v629, %v693
        %695 = vmatmul.f32.gmra.mxu0 %v324
        %v696 = vpop.f32.mrf.mxu0
        %v697 = vadd.f32 %v632, %v696
        %698 = vmatmul.f32.gmra.mxu0 %v327
        %v699 = vpop.f32.mrf.mxu0
        %v700 = vadd.f32 %v635, %v699
        %701 = vmatmul.f32.gmra.mxu0 %v329
        %v702 = vpop.f32.mrf.mxu0
        %v703 = vadd.f32 %v638, %v702
        %704 = vmatmul.f32.gmra.mxu0 %v332
        %v705 = vpop.f32.mrf.mxu0
        %v706 = vadd.f32 %v641, %v705
        %707 = vmatmul.f32.gmra.mxu0 %v334
        %v708 = vpop.f32.mrf.mxu0
        %v709 = vadd.f32 %v644, %v708
        %710 = vmatmul.f32.gmra.mxu0 %v337
        %v711 = vpop.f32.mrf.mxu0
        %v712 = vadd.f32 %v647, %v711
        %713 = vmatmul.f32.gmra.mxu0 %v339
        %v714 = vpop.f32.mrf.mxu0
        %v715 = vadd.f32 %v650, %v714
        %716 = vmatmul.f32.gmra.mxu0 %v342
        %v717 = vpop.f32.mrf.mxu0
        %v718 = vadd.f32 %v653, %v717
        %719 = vmatmul.f32.gmra.mxu0 %v344
        %v720 = vpop.f32.mrf.mxu0
        %v721 = vadd.f32 %v656, %v720
        %722 = vmatmul.f32.gmra.mxu0 %v347
        %v723 = vpop.f32.mrf.mxu0
        %v724 = vadd.f32 %v659, %v723
        %725 = vmatmul.f32.gmra.mxu0 %v349
        %v726 = vpop.f32.mrf.mxu0
        %v727 = vadd.f32 %v662, %v726
        %728 = vmatmul.f32.gmra.mxu0 %v352
        %v729 = vpop.f32.mrf.mxu0
        %v730 = vadd.f32 %v665, %v729
        %731 = vmatmul.f32.gmra.mxu0 %v354
        %v732 = vpop.f32.mrf.mxu0
        %v733 = vadd.f32 %v668, %v732
        %734 = vmatmul.f32.gmra.mxu0 %v357
        %v735 = vpop.f32.mrf.mxu0
        %v736 = vadd.f32 %v671, %v735
        %737 = vmatmul.f32.gmra.mxu0 %v359
        %v738 = vpop.f32.mrf.mxu0
        %v739 = vadd.f32 %v674, %v738
        %740 = vdwg.mxu0
        %741 = vmatpush.msra.mxu0 %v514
        %742 = vmatpush.msra.mxu0 %v513
        %743 = vmatpush.msra.mxu0 %v512
        %744 = vmatpush.msra.mxu0 %v511
        %745 = vmatpush.msra.mxu0 %v510
        %746 = vmatpush.msra.mxu0 %v509
        %747 = vmatpush.msra.mxu0 %v508
        %748 = vmatpush.msra.mxu0 %v507
        %749 = vmatpush.msra.mxu0 %v506
        %750 = vmatpush.msra.mxu0 %v505
        %751 = vmatpush.msra.mxu0 %v504
        %752 = vmatpush.msra.mxu0 %v503
        %753 = vmatpush.msra.mxu0 %v502
        %754 = vmatpush.msra.mxu0 %v501
        %755 = vmatpush.msra.mxu0 %v500
        %756 = vmatpush.msra.mxu0 %v499
        %757 = vmatmul.f32.gmra.mxu0 %v379
        %v758 = vpop.f32.mrf.mxu0
        %v759 = vadd.f32 %v694, %v758
        %760 = vmatmul.f32.gmra.mxu0 %v381
        %v761 = vpop.f32.mrf.mxu0
        %v762 = vadd.f32 %v697, %v761
        %763 = vmatmul.f32.gmra.mxu0 %v384
        %v764 = vpop.f32.mrf.mxu0
        %v765 = vadd.f32 %v700, %v764
        %766 = vmatmul.f32.gmra.mxu0 %v386
        %v767 = vpop.f32.mrf.mxu0
        %v768 = vadd.f32 %v703, %v767
        %769 = vmatmul.f32.gmra.mxu0 %v389
        %v770 = vpop.f32.mrf.mxu0
        %v771 = vadd.f32 %v706, %v770
        %772 = vmatmul.f32.gmra.mxu0 %v391
        %v773 = vpop.f32.mrf.mxu0
        %v774 = vadd.f32 %v709, %v773
        %775 = vmatmul.f32.gmra.mxu0 %v394
        %v776 = vpop.f32.mrf.mxu0
        %v777 = vadd.f32 %v712, %v776
        %778 = vmatmul.f32.gmra.mxu0 %v396
        %v779 = vpop.f32.mrf.mxu0
        %v780 = vadd.f32 %v715, %v779
        %781 = vmatmul.f32.gmra.mxu0 %v399
        %v782 = vpop.f32.mrf.mxu0
        %v783 = vadd.f32 %v718, %v782
        %784 = vmatmul.f32.gmra.mxu0 %v401
        %v785 = vpop.f32.mrf.mxu0
        %v786 = vadd.f32 %v721, %v785
        %787 = vmatmul.f32.gmra.mxu0 %v404
        %v788 = vpop.f32.mrf.mxu0
        %v789 = vadd.f32 %v724, %v788
        %790 = vmatmul.f32.gmra.mxu0 %v406
        %v791 = vpop.f32.mrf.mxu0
        %v792 = vadd.f32 %v727, %v791
        %793 = vmatmul.f32.gmra.mxu0 %v409
        %v794 = vpop.f32.mrf.mxu0
        %v795 = vadd.f32 %v730, %v794
        %796 = vmatmul.f32.gmra.mxu0 %v411
        %v797 = vpop.f32.mrf.mxu0
        %v798 = vadd.f32 %v733, %v797
        %799 = vmatmul.f32.gmra.mxu0 %v414
        %v800 = vpop.f32.mrf.mxu0
        %v801 = vadd.f32 %v736, %v800
        %802 = vmatmul.f32.gmra.mxu0 %v416
        %v803 = vpop.f32.mrf.mxu0
        %v804 = vadd.f32 %v739, %v803
        %805 = vdwg.mxu0
        %806 = vmatpush.msra.mxu0 %v530
        %807 = vmatpush.msra.mxu0 %v529
        %808 = vmatpush.msra.mxu0 %v528
        %809 = vmatpush.msra.mxu0 %v527
        %810 = vmatpush.msra.mxu0 %v526
        %811 = vmatpush.msra.mxu0 %v525
        %812 = vmatpush.msra.mxu0 %v524
        %813 = vmatpush.msra.mxu0 %v523
        %814 = vmatpush.msra.mxu0 %v522
        %815 = vmatpush.msra.mxu0 %v521
        %816 = vmatpush.msra.mxu0 %v520
        %817 = vmatpush.msra.mxu0 %v519
        %818 = vmatpush.msra.mxu0 %v518
        %819 = vmatpush.msra.mxu0 %v517
        %820 = vmatpush.msra.mxu0 %v516
        %821 = vmatpush.msra.mxu0 %v515
        %822 = vmatmul.f32.gmra.mxu0 %v268
        %v823 = vpop.f32.mrf.mxu0
        %v824 = vadd.f32 %v759, %v823
        %825 = vmatmul.f32.gmra.mxu0 %v269
        %v826 = vpop.f32.mrf.mxu0
        %v827 = vadd.f32 %v762, %v826
        %828 = vmatmul.f32.gmra.mxu0 %v271
        %v829 = vpop.f32.mrf.mxu0
        %v830 = vadd.f32 %v765, %v829
        %831 = vmatmul.f32.gmra.mxu0 %v272
        %v832 = vpop.f32.mrf.mxu0
        %v833 = vadd.f32 %v768, %v832
        %834 = vmatmul.f32.gmra.mxu0 %v274
        %v835 = vpop.f32.mrf.mxu0
        %v836 = vadd.f32 %v771, %v835
        %837 = vmatmul.f32.gmra.mxu0 %v275
        %v838 = vpop.f32.mrf.mxu0
        %v839 = vadd.f32 %v774, %v838
        %840 = vmatmul.f32.gmra.mxu0 %v277
        %v841 = vpop.f32.mrf.mxu0
        %v842 = vadd.f32 %v777, %v841
        %843 = vmatmul.f32.gmra.mxu0 %v278
        %v844 = vpop.f32.mrf.mxu0
        %v845 = vadd.f32 %v780, %v844
        %846 = vmatmul.f32.gmra.mxu0 %v280
        %v847 = vpop.f32.mrf.mxu0
        %v848 = vadd.f32 %v783, %v847
        %849 = vmatmul.f32.gmra.mxu0 %v281
        %v850 = vpop.f32.mrf.mxu0
        %v851 = vadd.f32 %v786, %v850
        %852 = vmatmul.f32.gmra.mxu0 %v283
        %v853 = vpop.f32.mrf.mxu0
        %v854 = vadd.f32 %v789, %v853
        %855 = vmatmul.f32.gmra.mxu0 %v284
        %v856 = vpop.f32.mrf.mxu0
        %v857 = vadd.f32 %v792, %v856
        %858 = vmatmul.f32.gmra.mxu0 %v286
        %v859 = vpop.f32.mrf.mxu0
        %v860 = vadd.f32 %v795, %v859
        %861 = vmatmul.f32.gmra.mxu0 %v287
        %v862 = vpop.f32.mrf.mxu0
        %v863 = vadd.f32 %v798, %v862
        %864 = vmatmul.f32.gmra.mxu0 %v289
        %v865 = vpop.f32.mrf.mxu0
        %v866 = vadd.f32 %v801, %v865
        %867 = vmatmul.f32.gmra.mxu0 %v290
        %v868 = vpop.f32.mrf.mxu0
        %v869 = vadd.f32 %v804, %v868
        %870 = vdwg.mxu0
        %871 = vmatpush.msra.mxu0 %v546
        %872 = vmatpush.msra.mxu0 %v545
        %873 = vmatpush.msra.mxu0 %v544
        %874 = vmatpush.msra.mxu0 %v543
        %875 = vmatpush.msra.mxu0 %v542
        %876 = vmatpush.msra.mxu0 %v541
        %877 = vmatpush.msra.mxu0 %v540
        %878 = vmatpush.msra.mxu0 %v539
        %879 = vmatpush.msra.mxu0 %v538
        %880 = vmatpush.msra.mxu0 %v537
        %881 = vmatpush.msra.mxu0 %v536
        %882 = vmatpush.msra.mxu0 %v535
        %883 = vmatpush.msra.mxu0 %v534
        %884 = vmatpush.msra.mxu0 %v533
        %885 = vmatpush.msra.mxu0 %v532
        %886 = vmatpush.msra.mxu0 %v531
        %887 = vmatmul.f32.gmra.mxu0 %v327
        %v888 = vpop.f32.mrf.mxu0
        %v889 = vadd.f32 %v824, %v888
        %890 = vmatmul.f32.gmra.mxu0 %v329
        %v891 = vpop.f32.mrf.mxu0
        %v892 = vadd.f32 %v827, %v891
        %893 = vmatmul.f32.gmra.mxu0 %v332
        %v894 = vpop.f32.mrf.mxu0
        %v895 = vadd.f32 %v830, %v894
        %896 = vmatmul.f32.gmra.mxu0 %v334
        %v897 = vpop.f32.mrf.mxu0
        %v898 = vadd.f32 %v833, %v897
        %899 = vmatmul.f32.gmra.mxu0 %v337
        %v900 = vpop.f32.mrf.mxu0
        %v901 = vadd.f32 %v836, %v900
        %902 = vmatmul.f32.gmra.mxu0 %v339
        %v903 = vpop.f32.mrf.mxu0
        %v904 = vadd.f32 %v839, %v903
        %905 = vmatmul.f32.gmra.mxu0 %v342
        %v906 = vpop.f32.mrf.mxu0
        %v907 = vadd.f32 %v842, %v906
        %908 = vmatmul.f32.gmra.mxu0 %v344
        %v909 = vpop.f32.mrf.mxu0
        %v910 = vadd.f32 %v845, %v909
        %911 = vmatmul.f32.gmra.mxu0 %v347
        %v912 = vpop.f32.mrf.mxu0
        %v913 = vadd.f32 %v848, %v912
        %914 = vmatmul.f32.gmra.mxu0 %v349
        %v915 = vpop.f32.mrf.mxu0
        %v916 = vadd.f32 %v851, %v915
        %917 = vmatmul.f32.gmra.mxu0 %v352
        %v918 = vpop.f32.mrf.mxu0
        %v919 = vadd.f32 %v854, %v918
        %920 = vmatmul.f32.gmra.mxu0 %v354
        %v921 = vpop.f32.mrf.mxu0
        %v922 = vadd.f32 %v857, %v921
        %923 = vmatmul.f32.gmra.mxu0 %v357
        %v924 = vpop.f32.mrf.mxu0
        %v925 = vadd.f32 %v860, %v924
        %926 = vmatmul.f32.gmra.mxu0 %v359
        %v927 = vpop.f32.mrf.mxu0
        %v928 = vadd.f32 %v863, %v927
        %929 = vmatmul.f32.gmra.mxu0 %v438
        %v930 = vpop.f32.mrf.mxu0
        %v931 = vadd.f32 %v866, %v930
        %932 = vmatmul.f32.gmra.mxu0 %v440
        %v933 = vpop.f32.mrf.mxu0
        %v934 = vadd.f32 %v869, %v933
        %935 = vdwg.mxu0
        %936 = vmatpush.msra.mxu0 %v562
        %937 = vmatpush.msra.mxu0 %v561
        %938 = vmatpush.msra.mxu0 %v560
        %939 = vmatpush.msra.mxu0 %v559
        %940 = vmatpush.msra.mxu0 %v558
        %941 = vmatpush.msra.mxu0 %v557
        %942 = vmatpush.msra.mxu0 %v556
        %943 = vmatpush.msra.mxu0 %v555
        %944 = vmatpush.msra.mxu0 %v554
        %945 = vmatpush.msra.mxu0 %v553
        %946 = vmatpush.msra.mxu0 %v552
        %947 = vmatpush.msra.mxu0 %v551
        %948 = vmatpush.msra.mxu0 %v550
        %949 = vmatpush.msra.mxu0 %v549
        %950 = vmatpush.msra.mxu0 %v548
        %951 = vmatpush.msra.mxu0 %v547
        %952 = vmatmul.f32.gmra.mxu0 %v384
        %v953 = vpop.f32.mrf.mxu0
        %v954 = vadd.f32 %v889, %v953
        %955 = vmatmul.f32.gmra.mxu0 %v386
        %v956 = vpop.f32.mrf.mxu0
        %v957 = vadd.f32 %v892, %v956
        %958 = vmatmul.f32.gmra.mxu0 %v389
        %v959 = vpop.f32.mrf.mxu0
        %v960 = vadd.f32 %v895, %v959
        %961 = vmatmul.f32.gmra.mxu0 %v391
        %v962 = vpop.f32.mrf.mxu0
        %v963 = vadd.f32 %v898, %v962
        %964 = vmatmul.f32.gmra.mxu0 %v394
        %v965 = vpop.f32.mrf.mxu0
        %v966 = vadd.f32 %v901, %v965
        %967 = vmatmul.f32.gmra.mxu0 %v396
        %v968 = vpop.f32.mrf.mxu0
        %v969 = vadd.f32 %v904, %v968
        %970 = vmatmul.f32.gmra.mxu0 %v399
        %v971 = vpop.f32.mrf.mxu0
        %v972 = vadd.f32 %v907, %v971
        %973 = vmatmul.f32.gmra.mxu0 %v401
        %v974 = vpop.f32.mrf.mxu0
        %v975 = vadd.f32 %v910, %v974
        %976 = vmatmul.f32.gmra.mxu0 %v404
        %v977 = vpop.f32.mrf.mxu0
        %v978 = vadd.f32 %v913, %v977
        %979 = vmatmul.f32.gmra.mxu0 %v406
        %v980 = vpop.f32.mrf.mxu0
        %v981 = vadd.f32 %v916, %v980
        %982 = vmatmul.f32.gmra.mxu0 %v409
        %v983 = vpop.f32.mrf.mxu0
        %v984 = vadd.f32 %v919, %v983
        %985 = vmatmul.f32.gmra.mxu0 %v411
        %v986 = vpop.f32.mrf.mxu0
        %v987 = vadd.f32 %v922, %v986
        %988 = vmatmul.f32.gmra.mxu0 %v414
        %v989 = vpop.f32.mrf.mxu0
        %v990 = vadd.f32 %v925, %v989
        %991 = vmatmul.f32.gmra.mxu0 %v416
        %v992 = vpop.f32.mrf.mxu0
        %v993 = vadd.f32 %v928, %v992
        %994 = vmatmul.f32.gmra.mxu0 %v445
        %v995 = vpop.f32.mrf.mxu0
        %v996 = vadd.f32 %v931, %v995
        %997 = vmatmul.f32.gmra.mxu0 %v447
        %v998 = vpop.f32.mrf.mxu0
        %v999 = vadd.f32 %v934, %v998
        %1000 = vdwg.mxu0
        %1001 = vmatpush.msra.mxu0 %v578
        %1002 = vmatpush.msra.mxu0 %v577
        %1003 = vmatpush.msra.mxu0 %v576
        %1004 = vmatpush.msra.mxu0 %v575
        %1005 = vmatpush.msra.mxu0 %v574
        %1006 = vmatpush.msra.mxu0 %v573
        %1007 = vmatpush.msra.mxu0 %v572
        %1008 = vmatpush.msra.mxu0 %v571
        %1009 = vmatpush.msra.mxu0 %v570
        %1010 = vmatpush.msra.mxu0 %v569
        %1011 = vmatpush.msra.mxu0 %v568
        %1012 = vmatpush.msra.mxu0 %v567
        %1013 = vmatpush.msra.mxu0 %v566
        %1014 = vmatpush.msra.mxu0 %v565
        %1015 = vmatpush.msra.mxu0 %v564
        %1016 = vmatpush.msra.mxu0 %v563
        %1017 = vmatmul.f32.gmra.mxu0 %v271
        %v1018 = vpop.f32.mrf.mxu0
        %v1019 = vadd.f32 %v954, %v1018
        %1020 = vmatmul.f32.gmra.mxu0 %v272
        %v1021 = vpop.f32.mrf.mxu0
        %v1022 = vadd.f32 %v957, %v1021
        %1023 = vmatmul.f32.gmra.mxu0 %v274
        %v1024 = vpop.f32.mrf.mxu0
        %v1025 = vadd.f32 %v960, %v1024
        %1026 = vmatmul.f32.gmra.mxu0 %v275
        %v1027 = vpop.f32.mrf.mxu0
        %v1028 = vadd.f32 %v963, %v1027
        %1029 = vmatmul.f32.gmra.mxu0 %v277
        %v1030 = vpop.f32.mrf.mxu0
        %v1031 = vadd.f32 %v966, %v1030
        %1032 = vmatmul.f32.gmra.mxu0 %v278
        %v1033 = vpop.f32.mrf.mxu0
        %v1034 = vadd.f32 %v969, %v1033
        %1035 = vmatmul.f32.gmra.mxu0 %v280
        %v1036 = vpop.f32.mrf.mxu0
        %v1037 = vadd.f32 %v972, %v1036
        %1038 = vmatmul.f32.gmra.mxu0 %v281
        %v1039 = vpop.f32.mrf.mxu0
        %v1040 = vadd.f32 %v975, %v1039
        %1041 = vmatmul.f32.gmra.mxu0 %v283
        %v1042 = vpop.f32.mrf.mxu0
        %v1043 = vadd.f32 %v978, %v1042
        %1044 = vmatmul.f32.gmra.mxu0 %v284
        %v1045 = vpop.f32.mrf.mxu0
        %v1046 = vadd.f32 %v981, %v1045
        %1047 = vmatmul.f32.gmra.mxu0 %v286
        %v1048 = vpop.f32.mrf.mxu0
        %v1049 = vadd.f32 %v984, %v1048
        %1050 = vmatmul.f32.gmra.mxu0 %v287
        %v1051 = vpop.f32.mrf.mxu0
        %v1052 = vadd.f32 %v987, %v1051
        %1053 = vmatmul.f32.gmra.mxu0 %v289
        %v1054 = vpop.f32.mrf.mxu0
        %v1055 = vadd.f32 %v990, %v1054
        %1056 = vmatmul.f32.gmra.mxu0 %v290
        %v1057 = vpop.f32.mrf.mxu0
        %v1058 = vadd.f32 %v993, %v1057
        %1059 = vmatmul.f32.gmra.mxu0 %v292
        %v1060 = vpop.f32.mrf.mxu0
        %v1061 = vadd.f32 %v996, %v1060
        %1062 = vmatmul.f32.gmra.mxu0 %v293
        %v1063 = vpop.f32.mrf.mxu0
        %v1064 = vadd.f32 %v999, %v1063
        %1065 = vdwg.mxu0
        %1066 = vmatpush.msra.mxu0 %v594
        %1067 = vmatpush.msra.mxu0 %v593
        %1068 = vmatpush.msra.mxu0 %v592
        %1069 = vmatpush.msra.mxu0 %v591
        %1070 = vmatpush.msra.mxu0 %v590
        %1071 = vmatpush.msra.mxu0 %v589
        %1072 = vmatpush.msra.mxu0 %v588
        %1073 = vmatpush.msra.mxu0 %v587
        %1074 = vmatpush.msra.mxu0 %v586
        %1075 = vmatpush.msra.mxu0 %v585
        %1076 = vmatpush.msra.mxu0 %v584
        %1077 = vmatpush.msra.mxu0 %v583
        %1078 = vmatpush.msra.mxu0 %v582
        %1079 = vmatpush.msra.mxu0 %v581
        %1080 = vmatpush.msra.mxu0 %v580
        %1081 = vmatpush.msra.mxu0 %v579
        %1082 = vmatmul.f32.gmra.mxu0 %v332
        %v1083 = vpop.f32.mrf.mxu0
        %v1084 = vadd.f32 %v1019, %v1083
        %1085 = vmatmul.f32.gmra.mxu0 %v334
        %v1086 = vpop.f32.mrf.mxu0
        %v1087 = vadd.f32 %v1022, %v1086
        %1088 = vmatmul.f32.gmra.mxu0 %v337
        %v1089 = vpop.f32.mrf.mxu0
        %v1090 = vadd.f32 %v1025, %v1089
        %1091 = vmatmul.f32.gmra.mxu0 %v339
        %v1092 = vpop.f32.mrf.mxu0
        %v1093 = vadd.f32 %v1028, %v1092
        %1094 = vmatmul.f32.gmra.mxu0 %v342
        %v1095 = vpop.f32.mrf.mxu0
        %v1096 = vadd.f32 %v1031, %v1095
        %1097 = vmatmul.f32.gmra.mxu0 %v344
        %v1098 = vpop.f32.mrf.mxu0
        %v1099 = vadd.f32 %v1034, %v1098
        %1100 = vmatmul.f32.gmra.mxu0 %v347
        %v1101 = vpop.f32.mrf.mxu0
        %v1102 = vadd.f32 %v1037, %v1101
        %1103 = vmatmul.f32.gmra.mxu0 %v349
        %v1104 = vpop.f32.mrf.mxu0
        %v1105 = vadd.f32 %v1040, %v1104
        %1106 = vmatmul.f32.gmra.mxu0 %v352
        %v1107 = vpop.f32.mrf.mxu0
        %v1108 = vadd.f32 %v1043, %v1107
        %1109 = vmatmul.f32.gmra.mxu0 %v354
        %v1110 = vpop.f32.mrf.mxu0
        %v1111 = vadd.f32 %v1046, %v1110
        %1112 = vmatmul.f32.gmra.mxu0 %v357
        %v1113 = vpop.f32.mrf.mxu0
        %v1114 = vadd.f32 %v1049, %v1113
        %1115 = vmatmul.f32.gmra.mxu0 %v359
        %v1116 = vpop.f32.mrf.mxu0
        %v1117 = vadd.f32 %v1052, %v1116
        %1118 = vmatmul.f32.gmra.mxu0 %v438
        %v1119 = vpop.f32.mrf.mxu0
        %v1120 = vadd.f32 %v1055, %v1119
        %1121 = vmatmul.f32.gmra.mxu0 %v440
        %v1122 = vpop.f32.mrf.mxu0
        %v1123 = vadd.f32 %v1058, %v1122
        %1124 = vmatmul.f32.gmra.mxu0 %v455
        %v1125 = vpop.f32.mrf.mxu0
        %v1126 = vadd.f32 %v1061, %v1125
        %1127 = vmatmul.f32.gmra.mxu0 %v457
        %v1128 = vpop.f32.mrf.mxu0
        %v1129 = vadd.f32 %v1064, %v1128
        %1130 = vdwg.mxu0
        %1131 = vmatpush.msra.mxu0 %v610
        %1132 = vmatpush.msra.mxu0 %v609
        %1133 = vmatpush.msra.mxu0 %v608
        %1134 = vmatpush.msra.mxu0 %v607
        %1135 = vmatpush.msra.mxu0 %v606
        %1136 = vmatpush.msra.mxu0 %v605
        %1137 = vmatpush.msra.mxu0 %v604
        %1138 = vmatpush.msra.mxu0 %v603
        %1139 = vmatpush.msra.mxu0 %v602
        %1140 = vmatpush.msra.mxu0 %v601
        %1141 = vmatpush.msra.mxu0 %v600
        %1142 = vmatpush.msra.mxu0 %v599
        %1143 = vmatpush.msra.mxu0 %v598
        %1144 = vmatpush.msra.mxu0 %v597
        %1145 = vmatpush.msra.mxu0 %v596
        %1146 = vmatpush.msra.mxu0 %v595
        %1147 = vmatmul.f32.gmra.mxu0 %v389
        %v1148 = vpop.f32.mrf.mxu0
        %v1149 = vadd.f32 %v1084, %v1148
        %1150 = vmatmul.f32.gmra.mxu0 %v391
        %v1151 = vpop.f32.mrf.mxu0
        %v1152 = vadd.f32 %v1087, %v1151
        %1153 = vmatmul.f32.gmra.mxu0 %v394
        %v1154 = vpop.f32.mrf.mxu0
        %v1155 = vadd.f32 %v1090, %v1154
        %1156 = vmatmul.f32.gmra.mxu0 %v396
        %v1157 = vpop.f32.mrf.mxu0
        %v1158 = vadd.f32 %v1093, %v1157
        %1159 = vmatmul.f32.gmra.mxu0 %v399
        %v1160 = vpop.f32.mrf.mxu0
        %v1161 = vadd.f32 %v1096, %v1160
        %1162 = vmatmul.f32.gmra.mxu0 %v401
        %v1163 = vpop.f32.mrf.mxu0
        %v1164 = vadd.f32 %v1099, %v1163
        %1165 = vmatmul.f32.gmra.mxu0 %v404
        %v1166 = vpop.f32.mrf.mxu0
        %v1167 = vadd.f32 %v1102, %v1166
        %1168 = vmatmul.f32.gmra.mxu0 %v406
        %v1169 = vpop.f32.mrf.mxu0
        %v1170 = vadd.f32 %v1105, %v1169
        %1171 = vmatmul.f32.gmra.mxu0 %v409
        %v1172 = vpop.f32.mrf.mxu0
        %v1173 = vadd.f32 %v1108, %v1172
        %1174 = vmatmul.f32.gmra.mxu0 %v411
        %v1175 = vpop.f32.mrf.mxu0
        %v1176 = vadd.f32 %v1111, %v1175
        %1177 = vmatmul.f32.gmra.mxu0 %v414
        %v1178 = vpop.f32.mrf.mxu0
        %v1179 = vadd.f32 %v1114, %v1178
        %1180 = vmatmul.f32.gmra.mxu0 %v416
        %v1181 = vpop.f32.mrf.mxu0
        %v1182 = vadd.f32 %v1117, %v1181
        %1183 = vmatmul.f32.gmra.mxu0 %v445
        %v1184 = vpop.f32.mrf.mxu0
        %v1185 = vadd.f32 %v1120, %v1184
        %1186 = vmatmul.f32.gmra.mxu0 %v447
        %v1187 = vpop.f32.mrf.mxu0
        %v1188 = vadd.f32 %v1123, %v1187
        %1189 = vmatmul.f32.gmra.mxu0 %v462
        %v1190 = vpop.f32.mrf.mxu0
        %v1191 = vadd.f32 %v1126, %v1190
        %1192 = vmatmul.f32.gmra.mxu0 %v464
        %v1193 = vpop.f32.mrf.mxu0
        %v1194 = vadd.f32 %v1129, %v1193
        %1195 = vdwg.mxu0
        %1196 = vst [vmem:[%s247] sm:$0xff] %v1149
        %1197 = vst [vmem:[%s247 + $0x8] sm:$0xff] %v1152
        %1198 = vst [vmem:[%s247 + $0x10] sm:$0xff] %v1155
        %1199 = vst [vmem:[%s247 + $0x18] sm:$0xff] %v1158
        %1200 = vst [vmem:[%s247 + $0x20] sm:$0xff] %v1161
        %1201 = vst [vmem:[%s247 + $0x28] sm:$0xff] %v1164
        %1202 = vst [vmem:[%s247 + $0x30] sm:$0xff] %v1167
        %1203 = vst [vmem:[%s247 + $0x38] sm:$0xff] %v1170
        %1204 = vst [vmem:[%s247 + $0x40] sm:$0xff] %v1173
        %1205 = vst [vmem:[%s247 + $0x48] sm:$0xff] %v1176
        %1206 = vst [vmem:[%s247 + $0x50] sm:$0xff] %v1179
        %1207 = vst [vmem:[%s247 + $0x58] sm:$0xff] %v1182
        %1208 = vst [vmem:[%s247 + $0x60] sm:$0xff] %v1185
        %1209 = vst [vmem:[%s247 + $0x68] sm:$0xff] %v1188
        %1210 = vst [vmem:[%s247 + $0x70] sm:$0xff] %v1191
        %1211 = vst [vmem:[%s247 + $0x78] sm:$0xff] %v1194
        %v1212 = vadd.f32 %v1149, %v1152
        %v1213 = vadd.f32 %v1212, %v1155
        %v1214 = vadd.f32 %v1213, %v1158
        %v1215 = vadd.f32 %v1214, %v1161
        %v1216 = vadd.f32 %v1215, %v1164
        %v1217 = vadd.f32 %v1216, %v1167
        %v1218 = vadd.f32 %v1217, %v1170
        %v1219 = vadd.f32 %v1218, %v1173
        %v1220 = vadd.f32 %v1219, %v1176
        %v1221 = vadd.f32 %v1220, %v1179
        %v1222 = vadd.f32 %v1221, %v1182
        %v1223 = vadd.f32 %v1222, %v1185
        %v1224 = vadd.f32 %v1223, %v1188
        %v1225 = vadd.f32 %v1224, %v1191
        %v1226 = vadd.f32 %v1225, %v1194
        %v1227 = vrot.slane %v1226, 4
        %v1228 = vadd.f32 %v1226, %v1227
        %v1229 = vrot.slane %v1228, 2
        %v1230 = vadd.f32 %v1228, %v1229
        %v1231 = vrot.slane %v1230, 1
        %v1232 = vadd.f32 %v1230, %v1231
        %v1233 = vmul.f32 %v1149, %v1149
        %v1234 = vmul.f32 %v1152, %v1152
        %v1235 = vmul.f32 %v1155, %v1155
        %v1236 = vmul.f32 %v1158, %v1158
        %v1237 = vmul.f32 %v1161, %v1161
        %v1238 = vmul.f32 %v1164, %v1164
        %v1239 = vmul.f32 %v1167, %v1167
        %v1240 = vmul.f32 %v1170, %v1170
        %v1241 = vmul.f32 %v1173, %v1173
        %v1242 = vmul.f32 %v1176, %v1176
        %v1243 = vmul.f32 %v1179, %v1179
        %v1244 = vmul.f32 %v1182, %v1182
        %v1245 = vmul.f32 %v1185, %v1185
        %v1246 = vmul.f32 %v1188, %v1188
        %v1247 = vmul.f32 %v1191, %v1191
        %v1248 = vmul.f32 %v1194, %v1194
        %v1249 = vadd.f32 %v1233, %v1234
        %v1250 = vadd.f32 %v1249, %v1235
        %v1251 = vadd.f32 %v1250, %v1236
        %v1252 = vadd.f32 %v1251, %v1237
        %v1253 = vadd.f32 %v1252, %v1238
        %v1254 = vadd.f32 %v1253, %v1239
        %v1255 = vadd.f32 %v1254, %v1240
        %v1256 = vadd.f32 %v1255, %v1241
        %v1257 = vadd.f32 %v1256, %v1242
        %v1258 = vadd.f32 %v1257, %v1243
        %v1259 = vadd.f32 %v1258, %v1244
        %v1260 = vadd.f32 %v1259, %v1245
        %v1261 = vadd.f32 %v1260, %v1246
        %v1262 = vadd.f32 %v1261, %v1247
        %v1263 = vadd.f32 %v1262, %v1248
        %v1264 = vrot.slane %v1263, 4
        %v1265 = vadd.f32 %v1263, %v1264
        %v1266 = vrot.slane %v1265, 2
        %v1267 = vadd.f32 %v1265, %v1266
        %v1268 = vrot.slane %v1267, 1
        %v1269 = vadd.f32 %v1267, %v1268
        %vm1270 = vcmask 1040384
        %v1271 = vsel %vm1270, %v1232, %v1269
        %1272 = vst [vmem:[%s254] sm:$0x3] %v1271
        %s1273 = sand.u32 %s136, 1
        %s1274 = scalar_lea.sflag [#allocation3], %s1273
        %s1275 = sand.u32 %s136, 1
        %s1276 = smul.addr %s1275, 128
        %s1277 = scalar_lea.vmem [#allocation2], %s1276
        %s1278 = sand.u32 %s164, 1
        %s1279 = scalar_lea.sflag [#allocation5], %s1278
        %s1280 = sand.u32 %s164, 1
        %s1281 = smul.addr %s1280, 2
        %s1282 = scalar_lea.vmem [#allocation4], %s1281
        // Predicated region
        $region37: #{tpu_custom_call.1} parent=35 // pred_check
          %p1283 = pneg %p146
        $region38: #{tpu_custom_call.1} parent=35 // pred_check_branch
          %1285 = sbr.rel (%p1283) target = $region40
        $region39: #{tpu_custom_call.1} parent=35 // pred_region
          %s1286 = smul.u32 8, %s28
          %1288 = vsyncadd %s1274, 0
          %s1289 = smul.addr %s1286, 2
          %s1290 = smul.addr %s27, 32
          %s1291 = sadd.s32 %s1289, %s1290
          %s1292 = smul.addr %s1291, 8
          %s1293 = scalar_lea.hbm %s4, %s1292
          %s1294 = sshll.u32 %s1277, 4
          %s1295 = int_to_ptr.vmem [resolvable:$true] %s1294
          %s1296 = sshll.u32 %s1293, 4
          %s1297 = int_to_ptr.hbm [resolvable:$true] %s1296
          %1302 = dma.vmem_to_hbm [thread:$0]  %s1295, 2048, %s1297, %s1274, 128, 128, 8
        $region40: #{tpu_custom_call.1} parent=35 // pred_fallthru
          _
        // Predicated region
        $region41: #{tpu_custom_call.1} parent=35 // pred_check
          %p1303 = pneg %p174
        $region42: #{tpu_custom_call.1} parent=35 // pred_check_branch
          %1305 = sbr.rel (%p1303) target = $region44
        $region43: #{tpu_custom_call.1} parent=35 // pred_region
          %1307 = vsyncadd %s1279, 0
          %s1308 = smul.addr %s27, 2
          %s1309 = sadd.s32 %s28, %s1308
          %s1310 = smul.addr %s1309, 2
          %s1311 = scalar_lea.hbm %s5, %s1310
          %s1313 = sshll.u32 %s1282, 4
          %s1314 = int_to_ptr.vmem [resolvable:$true] %s1313
          %s1315 = sshll.u32 %s1311, 4
          %s1316 = int_to_ptr.hbm [resolvable:$true] %s1315
          %1318 = dma.vmem_to_hbm [thread:$0]  %s1314, 32, %s1316, %s1279
        $region44: #{tpu_custom_call.1} parent=35 // pred_fallthru
          _
      $region36: #{tpu_custom_call.1} parent=5 // pred_fallthru
        _
      %p1319 = scmp.le.s32.totalorder 2, %s18
      // Predicated region
      $region45: #{tpu_custom_call.1} parent=5 // pred_check
        %p1320 = pneg %p1319
      $region46: #{tpu_custom_call.1} parent=5 // pred_check_branch
        %1322 = sbr.rel (%p1320) target = $region48
      $region47: #{tpu_custom_call.1} parent=5 // pred_region
        %s1323 = ssub.s32 %s18, 2
        // Predicated region
        $region49: #{tpu_custom_call.1} parent=47 // pred_check
          %p1324 = pneg %p152
        $region50: #{tpu_custom_call.1} parent=47 // pred_check_branch
          %1326 = sbr.rel (%p1324) target = $region52
        $region51: #{tpu_custom_call.1} parent=47 // pred_region
          %s1327 = sand.u32 %s137, 1
          %s1328 = scalar_lea.sflag [#allocation3], %s1327
          %s1329 = sand.u32 %s137, 1
          %s1330 = smul.addr %s1329, 128
          %s1331 = scalar_lea.vmem [#allocation2], %s1330
          %1333 = dma.done %s1328, 2048
        $region52: #{tpu_custom_call.1} parent=47 // pred_fallthru
          _
        // Predicated region
        $region53: #{tpu_custom_call.1} parent=47 // pred_check
          %p1334 = pneg %p180
        $region54: #{tpu_custom_call.1} parent=47 // pred_check_branch
          %1336 = sbr.rel (%p1334) target = $region56
        $region55: #{tpu_custom_call.1} parent=47 // pred_region
          %s1337 = sand.u32 %s165, 1
          %s1338 = scalar_lea.sflag [#allocation5], %s1337
          %s1339 = sand.u32 %s165, 1
          %s1340 = smul.addr %s1339, 2
          %s1341 = scalar_lea.vmem [#allocation4], %s1340
          %1343 = dma.done %s1338, 32
        $region56: #{tpu_custom_call.1} parent=47 // pred_fallthru
          _
      $region48: #{tpu_custom_call.1} parent=5 // pred_fallthru
        _
    $region6: #{tpu_custom_call.1} parent=1 // loop_footer
      %s22 = sadd.s32 1, %s18
    $region7: #{tpu_custom_call.1} parent=1 // loop_footer_branch
      %17 = sbr.rel target = $region3
    $region8: #{tpu_custom_call.1} parent=1 // loop_exit
      _
    %1344 = vsyncpa [#allocation3], 1
    %s1345 = scalar_lea.sflag [#allocation3], 1
    %1346 = vsyncpa %s1345, 1
    %1347 = vsyncpa [#allocation5], 1
    %s1348 = scalar_lea.sflag [#allocation5], 1
    %1349 = vsyncpa %s1348, 1

</llo_original>
